<compile_context>
chip_gen: v7x
topology: tpu7x:2x2x1
jax: 0.10.0
libtpu: 0.0.40
codegen_flags: <defaults>
</compile_context>

<pallas_src>
import functools

import jax
import jax.numpy as jnp
from jax import lax
from jax.experimental import pallas as pl
from jax.experimental.pallas import tpu as pltpu


# ----------------------------------------------------------------------------
# Fused Block kernel (one grid step == one batch element)
# ----------------------------------------------------------------------------

def _block_kernel(x_ref, w_ref, b_ref, gamma_ref, beta_ref, o_ref, *,
                  groups, eps_ws, eps_gn):
    # x_ref     : (1, Cin, L + K - 1)   zero-padded input, NCL
    # w_ref     : (K, Cout, Cin)        raw conv weight (taps leading)
    # b_ref     : (Cout, 1)             conv bias
    # gamma_ref : (1, Cout, 1)          gamma * (scale + 1)   (per batch)
    # beta_ref  : (1, Cout, 1)          beta * (scale + 1) + shift
    # o_ref     : (1, Cout, L)
    K = w_ref.shape[0]
    Cout = o_ref.shape[1]
    L = o_ref.shape[2]

    # --- weight standardization over the K taps (unbiased=False), in VMEM ---
    # (recomputed per grid step; K*Cout*Cin elems -> negligible vs. a glue pass)
    w = w_ref[...]                                             # (K, Cout, Cin)
    wm = jnp.mean(w, axis=0, keepdims=True)
    wv = jnp.mean((w - wm) ** 2, axis=0, keepdims=True)
    w_std = (w - wm) * lax.rsqrt(wv + eps_ws)                  # (K, Cout, Cin)

    # --- conv1d(stride=1) as K shifted MXU matmuls on the resident x tile ---
    x = x_ref[0]                                               # (Cin, L+K-1)
    acc = jnp.dot(w_std[0], x[:, 0:L], preferred_element_type=jnp.float32)
    for k in range(1, K):                                      # K is static
        acc = acc + jnp.dot(w_std[k], x[:, k:k + L],
                            preferred_element_type=jnp.float32)
    h = acc + b_ref[...]                                       # (Cout, L)

    # --- GroupNorm: direct reduce over (C//groups, L), centered variance ---
    gs = Cout // groups
    h3 = h.reshape(groups, gs, L)
    inv_n = 1.0 / float(gs * L)
    mu = jnp.sum(jnp.sum(h3, axis=2, keepdims=True),
                 axis=1, keepdims=True) * inv_n                # (groups,1,1)
    d = h3 - mu
    var = jnp.sum(jnp.sum(d * d, axis=2, keepdims=True),
                  axis=1, keepdims=True) * inv_n
    y = (d * lax.rsqrt(var + eps_gn)).reshape(Cout, L)

    # --- pre-folded affine (gamma*(scale+1), beta*(scale+1)+shift) + SiLU ---
    y = y * gamma_ref[0] + beta_ref[0]                         # (Cout,1) bcast
    o_ref[0] = y * jax.nn.sigmoid(y)                           # SiLU


# ----------------------------------------------------------------------------
# Wrapper (thin glue: zero-pad L, reorder weight taps, fold the affine)
# ----------------------------------------------------------------------------

def block_forward(x, w, b, gn_gamma, gn_beta, scale_shift=None, *, groups=8):
    """PyTorch Block.forward. x:(B,Cin,L) NCL, w:(Cout,Cin,K), returns (B,Cout,L)."""
    B, Cin, L = x.shape
    Cout, Cin_w, K = w.shape
    assert Cin == Cin_w and Cout % groups == 0
    pad = (K - 1) // 2                                   # Block: k=3, padding=1
    Lp = L + 2 * pad

    x_pad = jnp.pad(x.astype(jnp.float32), ((0, 0), (0, 0), (pad, pad)))
    w_t = jnp.transpose(w.astype(jnp.float32), (2, 0, 1))       # (K, Cout, Cin)
    if b is None:
        b = jnp.zeros((Cout,), jnp.float32)
    b2 = b.reshape(Cout, 1).astype(jnp.float32)

    g = gn_gamma.reshape(1, Cout, 1).astype(jnp.float32)
    bt = gn_beta.reshape(1, Cout, 1).astype(jnp.float32)
    if scale_shift is not None:
        scale, shift = scale_shift
        s1 = scale.reshape(B, Cout, 1).astype(jnp.float32) + 1.0
        gamma_eff = g * s1
        beta_eff = bt * s1 + shift.reshape(B, Cout, 1).astype(jnp.float32)
    else:
        gamma_eff = jnp.broadcast_to(g, (B, Cout, 1))
        beta_eff = jnp.broadcast_to(bt, (B, Cout, 1))

    kernel = functools.partial(_block_kernel, groups=groups,
                               eps_ws=1e-5, eps_gn=1e-5)
    return pl.pallas_call(
        kernel,
        grid=(B,),
        out_shape=jax.ShapeDtypeStruct((B, Cout, L), jnp.float32),
        in_specs=[
            pl.BlockSpec((1, Cin, Lp), lambda bi: (bi, 0, 0)),
            pl.BlockSpec((K, Cout, Cin), lambda bi: (0, 0, 0)),
            pl.BlockSpec((Cout, 1), lambda bi: (0, 0)),
            pl.BlockSpec((1, Cout, 1), lambda bi: (bi, 0, 0)),
            pl.BlockSpec((1, Cout, 1), lambda bi: (bi, 0, 0)),
        ],
        out_specs=pl.BlockSpec((1, Cout, L), lambda bi: (bi, 0, 0)),
        compiler_params=pltpu.CompilerParams(
            dimension_semantics=("parallel",)),
    )(x_pad, w_t, b2, gamma_eff, beta_eff)


# ----------------------------------------------------------------------------
# Pure-JAX reference (for correctness check only)
# ----------------------------------------------------------------------------

def block_ref(x, w, b, gamma, beta, scale_shift=None, *, groups=8):
    eps = 1e-5
    m = jnp.mean(w, axis=-1, keepdims=True)
    v = jnp.mean((w - m) ** 2, axis=-1, keepdims=True)
    w_std = (w - m) * lax.rsqrt(v + eps)
    h = lax.conv_general_dilated(
        x, w_std, window_strides=(1,), padding=[(1, 1)],
        dimension_numbers=("NCH", "OIH", "NCH"),
        precision=lax.Precision.HIGHEST)
    h = h + b.reshape(1, -1, 1)
    B, C, L = h.shape
    gs = C // groups
    h3 = h.reshape(B, groups, gs * L)
    mu = jnp.mean(h3, axis=-1, keepdims=True)
    var = jnp.mean((h3 - mu) ** 2, axis=-1, keepdims=True)
    y = ((h3 - mu) * lax.rsqrt(var + eps)).reshape(B, C, L)
    y = y * gamma.reshape(1, -1, 1) + beta.reshape(1, -1, 1)
    if scale_shift is not None:
        scale, shift = scale_shift
        y = y * (scale + 1.0) + shift
    return y * jax.nn.sigmoid(y)


# ----------------------------------------------------------------------------
# Main
# ----------------------------------------------------------------------------

if __name__ == "__main__":
    B, Cin, Cout, L, GROUPS = 2, 64, 128, 128, 8   # lane-dense (Cout,L) tiles

    key = jax.random.PRNGKey(0)
    ks = jax.random.split(key, 7)
    x = jax.random.normal(ks[0], (B, Cin, L), dtype=jnp.float32)
    w = 0.05 * jax.random.normal(ks[1], (Cout, Cin, 3), dtype=jnp.float32)
    b = 0.05 * jax.random.normal(ks[2], (Cout,), dtype=jnp.float32)
    gamma = 1.0 + 0.02 * jax.random.normal(ks[3], (Cout,), dtype=jnp.float32)
    beta = 0.02 * jax.random.normal(ks[4], (Cout,), dtype=jnp.float32)
    scale = 0.1 * jax.random.normal(ks[5], (B, Cout, 1), dtype=jnp.float32)
    shift = 0.1 * jax.random.normal(ks[6], (B, Cout, 1), dtype=jnp.float32)

    fwd = jax.jit(functools.partial(block_forward, groups=GROUPS))
    fwd_plain = jax.jit(
        lambda x_, w_, b_, g_, bt_: block_forward(x_, w_, b_, g_, bt_, None,
                                                  groups=GROUPS))

    out = fwd(x, w, b, gamma, beta, (scale, shift))      # with scale/shift
    out2 = fwd_plain(x, w, b, gamma, beta)               # without scale/shift
    jax.block_until_ready((out, out2))

    assert out.shape == (B, Cout, L) and out.dtype == jnp.float32
    assert out2.shape == (B, Cout, L) and out2.dtype == jnp.float32

    ref = block_ref(x, w, b, gamma, beta, (scale, shift), groups=GROUPS)
    ref2 = block_ref(x, w, b, gamma, beta, None, groups=GROUPS)
    err = float(jnp.max(jnp.abs(out - ref)))
    err2 = float(jnp.max(jnp.abs(out2 - ref2)))
    assert err < 5e-3, err
    assert err2 < 5e-3, err2

    print("KERNEL_OK")
</pallas_src>

<mosaic_0001>
module attributes {stable_mosaic.version = 11 : i64} {
  func.func @_block_kernel(%arg0: i32, %arg1: memref<1x64x130xf32, #tpu.memory_space<vmem>>, %arg2: memref<3x128x64xf32, #tpu.memory_space<vmem>>, %arg3: memref<128x1xf32, #tpu.memory_space<vmem>>, %arg4: memref<1x128x1xf32, #tpu.memory_space<vmem>>, %arg5: memref<1x128x1xf32, #tpu.memory_space<vmem>>, %arg6: memref<1x128x128xf32, #tpu.memory_space<vmem>>) attributes {dimension_semantics = [#tpu.dimension_semantics<parallel>], iteration_bounds = array<i64: 2>, scalar_prefetch = 0 : i64, scratch_operands = 0 : i64, tpu.core_type = #tpu.core_type<tc>, window_params = [{transform_indices = @transform_0, window_bounds = array<i64: 1, 64, 130>}, {pipeline_mode = #tpu.pipeline_mode<synchronous>, transform_indices = @transform_1, window_bounds = array<i64: 3, 128, 64>}, {pipeline_mode = #tpu.pipeline_mode<synchronous>, transform_indices = @transform_2, window_bounds = array<i64: 128, 1>}, {transform_indices = @transform_3, window_bounds = array<i64: 1, 128, 1>}, {transform_indices = @transform_4, window_bounds = array<i64: 1, 128, 1>}, {transform_indices = @transform_5, window_bounds = array<i64: 1, 128, 128>}]} {
    %c0 = arith.constant 0 : index
    %c0_0 = arith.constant 0 : index
    %c0_1 = arith.constant 0 : index
    %0 = vector.load %arg2[%c0, %c0_0, %c0_1] : memref<3x128x64xf32, #tpu.memory_space<vmem>>, vector<3x128x64xf32>
    %cst = arith.constant dense<0.000000e+00> : vector<128x64xf32>
    %1 = vector.multi_reduction <add>, %0, %cst [0] : vector<3x128x64xf32> to vector<128x64xf32>
    %2 = vector.shape_cast %1 : vector<128x64xf32> to vector<1x128x64xf32>
    %cst_2 = arith.constant 3.000000e+00 : f32
    %3 = vector.broadcast %cst_2 : f32 to vector<1x128x64xf32>
    %4 = arith.divf %2, %3 : vector<1x128x64xf32>
    %5 = vector.broadcast %4 : vector<1x128x64xf32> to vector<3x128x64xf32>
    %6 = arith.subf %0, %5 : vector<3x128x64xf32>
    %7 = arith.mulf %6, %6 : vector<3x128x64xf32>
    %cst_3 = arith.constant dense<0.000000e+00> : vector<128x64xf32>
    %8 = vector.multi_reduction <add>, %7, %cst_3 [0] : vector<3x128x64xf32> to vector<128x64xf32>
    %9 = vector.shape_cast %8 : vector<128x64xf32> to vector<1x128x64xf32>
    %cst_4 = arith.constant 3.000000e+00 : f32
    %10 = vector.broadcast %cst_4 : f32 to vector<1x128x64xf32>
    %11 = arith.divf %9, %10 : vector<1x128x64xf32>
    %12 = vector.broadcast %4 : vector<1x128x64xf32> to vector<3x128x64xf32>
    %13 = arith.subf %0, %12 : vector<3x128x64xf32>
    %cst_5 = arith.constant 9.99999974E-6 : f32
    %14 = vector.broadcast %cst_5 : f32 to vector<1x128x64xf32>
    %15 = arith.addf %11, %14 : vector<1x128x64xf32>
    %16 = math.rsqrt %15 : vector<1x128x64xf32>
    %17 = vector.broadcast %16 : vector<1x128x64xf32> to vector<3x128x64xf32>
    %18 = arith.mulf %13, %17 : vector<3x128x64xf32>
    %c0_6 = arith.constant 0 : index
    %c0_7 = arith.constant 0 : index
    %c0_8 = arith.constant 0 : index
    %19 = vector.load %arg1[%c0_6, %c0_7, %c0_8] : memref<1x64x130xf32, #tpu.memory_space<vmem>>, vector<1x64x130xf32>
    %20 = vector.shape_cast %19 : vector<1x64x130xf32> to vector<64x130xf32>
    %21 = vector.extract_strided_slice %18 {offsets = [0, 0, 0], sizes = [1, 128, 64], strides = [1, 1, 1]} : vector<3x128x64xf32> to vector<1x128x64xf32>
    %22 = vector.shape_cast %21 : vector<1x128x64xf32> to vector<128x64xf32>
    %23 = vector.extract_strided_slice %20 {offsets = [0, 0], sizes = [64, 128], strides = [1, 1]} : vector<64x130xf32> to vector<64x128xf32>
    %cst_9 = arith.constant dense<0.000000e+00> : vector<128x128xf32>
    %24 = tpu.matmul %22, %23, %cst_9 {dimension_numbers = #tpu.dot_dimension_numbers<[1], [0], [0], [1], [0, 0, 1, 1], [], []>} : vector<128x64xf32>, vector<64x128xf32>, vector<128x128xf32> -> vector<128x128xf32>
    %25 = vector.extract_strided_slice %18 {offsets = [1, 0, 0], sizes = [1, 128, 64], strides = [1, 1, 1]} : vector<3x128x64xf32> to vector<1x128x64xf32>
    %26 = vector.shape_cast %25 : vector<1x128x64xf32> to vector<128x64xf32>
    %27 = vector.extract_strided_slice %20 {offsets = [0, 1], sizes = [64, 128], strides = [1, 1]} : vector<64x130xf32> to vector<64x128xf32>
    %cst_10 = arith.constant dense<0.000000e+00> : vector<128x128xf32>
    %28 = tpu.matmul %26, %27, %cst_10 {dimension_numbers = #tpu.dot_dimension_numbers<[1], [0], [0], [1], [0, 0, 1, 1], [], []>} : vector<128x64xf32>, vector<64x128xf32>, vector<128x128xf32> -> vector<128x128xf32>
    %29 = arith.addf %24, %28 : vector<128x128xf32>
    %30 = vector.extract_strided_slice %18 {offsets = [2, 0, 0], sizes = [1, 128, 64], strides = [1, 1, 1]} : vector<3x128x64xf32> to vector<1x128x64xf32>
    %31 = vector.shape_cast %30 : vector<1x128x64xf32> to vector<128x64xf32>
    %32 = vector.extract_strided_slice %20 {offsets = [0, 2], sizes = [64, 128], strides = [1, 1]} : vector<64x130xf32> to vector<64x128xf32>
    %cst_11 = arith.constant dense<0.000000e+00> : vector<128x128xf32>
    %33 = tpu.matmul %31, %32, %cst_11 {dimension_numbers = #tpu.dot_dimension_numbers<[1], [0], [0], [1], [0, 0, 1, 1], [], []>} : vector<128x64xf32>, vector<64x128xf32>, vector<128x128xf32> -> vector<128x128xf32>
    %34 = arith.addf %29, %33 : vector<128x128xf32>
    %c0_12 = arith.constant 0 : index
    %c0_13 = arith.constant 0 : index
    %35 = vector.load %arg3[%c0_12, %c0_13] : memref<128x1xf32, #tpu.memory_space<vmem>>, vector<128x1xf32>
    %36 = vector.broadcast %35 : vector<128x1xf32> to vector<128x128xf32>
    %37 = arith.addf %34, %36 : vector<128x128xf32>
    %38 = vector.shape_cast %37 : vector<128x128xf32> to vector<8x16x128xf32>
    %cst_14 = arith.constant dense<0.000000e+00> : vector<8x16xf32>
    %39 = vector.multi_reduction <add>, %38, %cst_14 [2] : vector<8x16x128xf32> to vector<8x16xf32>
    %40 = vector.shape_cast %39 : vector<8x16xf32> to vector<8x16x1xf32>
    %cst_15 = arith.constant dense<0.000000e+00> : vector<8x1xf32>
    %41 = vector.multi_reduction <add>, %40, %cst_15 [1] : vector<8x16x1xf32> to vector<8x1xf32>
    %42 = vector.shape_cast %41 : vector<8x1xf32> to vector<8x1x1xf32>
    %cst_16 = arith.constant 4.8828125E-4 : f32
    %43 = vector.broadcast %cst_16 : f32 to vector<8x1x1xf32>
    %44 = arith.mulf %42, %43 : vector<8x1x1xf32>
    %45 = vector.broadcast %44 : vector<8x1x1xf32> to vector<8x16x128xf32>
    %46 = arith.subf %38, %45 : vector<8x16x128xf32>
    %47 = arith.mulf %46, %46 : vector<8x16x128xf32>
    %cst_17 = arith.constant dense<0.000000e+00> : vector<8x16xf32>
    %48 = vector.multi_reduction <add>, %47, %cst_17 [2] : vector<8x16x128xf32> to vector<8x16xf32>
    %49 = vector.shape_cast %48 : vector<8x16xf32> to vector<8x16x1xf32>
    %cst_18 = arith.constant dense<0.000000e+00> : vector<8x1xf32>
    %50 = vector.multi_reduction <add>, %49, %cst_18 [1] : vector<8x16x1xf32> to vector<8x1xf32>
    %51 = vector.shape_cast %50 : vector<8x1xf32> to vector<8x1x1xf32>
    %cst_19 = arith.constant 4.8828125E-4 : f32
    %52 = vector.broadcast %cst_19 : f32 to vector<8x1x1xf32>
    %53 = arith.mulf %51, %52 : vector<8x1x1xf32>
    %cst_20 = arith.constant 9.99999974E-6 : f32
    %54 = vector.broadcast %cst_20 : f32 to vector<8x1x1xf32>
    %55 = arith.addf %53, %54 : vector<8x1x1xf32>
    %56 = math.rsqrt %55 : vector<8x1x1xf32>
    %57 = vector.broadcast %56 : vector<8x1x1xf32> to vector<8x16x128xf32>
    %58 = arith.mulf %46, %57 : vector<8x16x128xf32>
    %59 = vector.shape_cast %58 : vector<8x16x128xf32> to vector<128x128xf32>
    %c0_21 = arith.constant 0 : index
    %c0_22 = arith.constant 0 : index
    %c0_23 = arith.constant 0 : index
    %60 = vector.load %arg4[%c0_21, %c0_22, %c0_23] : memref<1x128x1xf32, #tpu.memory_space<vmem>>, vector<1x128x1xf32>
    %61 = vector.shape_cast %60 : vector<1x128x1xf32> to vector<128x1xf32>
    %62 = vector.broadcast %61 : vector<128x1xf32> to vector<128x128xf32>
    %63 = arith.mulf %59, %62 : vector<128x128xf32>
    %c0_24 = arith.constant 0 : index
    %c0_25 = arith.constant 0 : index
    %c0_26 = arith.constant 0 : index
    %64 = vector.load %arg5[%c0_24, %c0_25, %c0_26] : memref<1x128x1xf32, #tpu.memory_space<vmem>>, vector<1x128x1xf32>
    %65 = vector.shape_cast %64 : vector<1x128x1xf32> to vector<128x1xf32>
    %66 = vector.broadcast %65 : vector<128x1xf32> to vector<128x128xf32>
    %67 = arith.addf %63, %66 : vector<128x128xf32>
    %68 = arith.negf %67 : vector<128x128xf32>
    %69 = math.exp %68 : vector<128x128xf32>
    %cst_27 = arith.constant 1.000000e+00 : f32
    %70 = vector.broadcast %cst_27 : f32 to vector<128x128xf32>
    %71 = arith.addf %70, %69 : vector<128x128xf32>
    %72 = arith.divf %70, %71 : vector<128x128xf32>
    %73 = arith.mulf %67, %72 : vector<128x128xf32>
    %c0_28 = arith.constant 0 : index
    %c0_29 = arith.constant 0 : index
    %c0_30 = arith.constant 0 : index
    %74 = vector.load %arg6[%c0_28, %c0_29, %c0_30] : memref<1x128x128xf32, #tpu.memory_space<vmem>>, vector<1x128x128xf32>
    %75 = vector.shape_cast %74 : vector<1x128x128xf32> to vector<128x128xf32>
    %76 = vector.shape_cast %73 : vector<128x128xf32> to vector<1x128x128xf32>
    tpu.vector_store %arg6[%c0_28, %c0_29, %c0_30], %76 {strides = array<i32>} : memref<1x128x128xf32, #tpu.memory_space<vmem>>, vector<1x128x128xf32>,
    return
  }
  func.func @transform_0(%arg0: i32) -> (i32, i32, i32) {
    %c0_i32 = arith.constant 0 : i32
    %c0_i32_0 = arith.constant 0 : i32
    %c0_i32_1 = arith.constant 0 : i32
    return %arg0, %c0_i32, %c0_i32_0 : i32, i32, i32
  }
  func.func @transform_1(%arg0: i32) -> (i32, i32, i32) {
    %c0_i32 = arith.constant 0 : i32
    %c0_i32_0 = arith.constant 0 : i32
    %c0_i32_1 = arith.constant 0 : i32
    %c0_i32_2 = arith.constant 0 : i32
    return %c0_i32, %c0_i32_0, %c0_i32_1 : i32, i32, i32
  }
  func.func @transform_2(%arg0: i32) -> (i32, i32) {
    %c0_i32 = arith.constant 0 : i32
    %c0_i32_0 = arith.constant 0 : i32
    %c0_i32_1 = arith.constant 0 : i32
    return %c0_i32, %c0_i32_0 : i32, i32
  }
  func.func @transform_3(%arg0: i32) -> (i32, i32, i32) {
    %c0_i32 = arith.constant 0 : i32
    %c0_i32_0 = arith.constant 0 : i32
    %c0_i32_1 = arith.constant 0 : i32
    return %arg0, %c0_i32, %c0_i32_0 : i32, i32, i32
  }
  func.func @transform_4(%arg0: i32) -> (i32, i32, i32) {
    %c0_i32 = arith.constant 0 : i32
    %c0_i32_0 = arith.constant 0 : i32
    %c0_i32_1 = arith.constant 0 : i32
    return %arg0, %c0_i32, %c0_i32_0 : i32, i32, i32
  }
  func.func @transform_5(%arg0: i32) -> (i32, i32, i32) {
    %c0_i32 = arith.constant 0 : i32
    %c0_i32_0 = arith.constant 0 : i32
    %c0_i32_1 = arith.constant 0 : i32
    return %arg0, %c0_i32, %c0_i32_0 : i32, i32, i32
  }
}

</mosaic_0001>

<llo_original>
// kernel: mul.14
$region0: #{mul.14}
  #allocation0 [shape = 's32[1]{0}', space=sflag, size = 0x4, scoped, tag = 'scoped memory for mul.14']
  %s0 = inlined_call_operand.vmem [shape: f32[128], index: 0, kind: input, shape index: {}]
  %s1 = inlined_call_operand.vmem [shape: f32[2,128,1], index: 1, kind: output, shape index: {}]
  // Predicated region
  $region2: #{mul.14} parent=0 // pred_check
    _
  $region3: #{mul.14} parent=0 // pred_check_branch
    %3 = sbr.rel (0) target = $region5
  $region4: #{mul.14} parent=0 // pred_region
    _
  $region5: #{mul.14} parent=0 // pred_fallthru
    _
  %v4 = vld [vmem:[%s0] ss:$0 sm:$0xff]
  %5 = vst [vmem:[%s1] sm:$0x3] %v4

// kernel: block_forward.1
$region0: #{block_forward.1}
  #allocation0 [shape = 'u32[]', space=smem, size = 0x4, offset = 0x4, fixed_abs, tag = 'smem constant byte address 0x4 - core index']
  #allocation1 [shape = 'u32[144,128]{1,0:T(1,128)}', space=vmem, size = 0x12000, scoped, tag = 'internal scratch']
  %s0 = inlined_call_operand.vmem [shape: f32[2,64,130], index: 0, kind: input, shape index: {}]
  %s1 = inlined_call_operand.vmem [shape: f32[3,128,64], index: 1, kind: input, shape index: {}]
  %s2 = inlined_call_operand.vmem [shape: f32[128,1], index: 2, kind: input, shape index: {}]
  %s3 = inlined_call_operand.vmem [shape: f32[2,128,1], index: 3, kind: input, shape index: {}]
  %s4 = inlined_call_operand.vmem [shape: f32[2,128,1], index: 4, kind: input, shape index: {}]
  %s5 = inlined_call_operand.hbm [shape: f32[2,128,128], index: 5, kind: output, shape index: {}]
  %s6 = sld [smem:[#allocation0]]
  $region53: #{block_forward.1} parent=0
    _
  %s8 = ssub.s32 1, %s6
  %s9 = scalar_select 0, %s8, %s6
  $region1: #{block_forward.1} parent=0
    #allocation2 [shape = 'u8[131072]{0}', space=vmem, size = 0x20000, scoped, tag = 'output window, operand 0']
    #allocation3 [shape = 's32[2]{0}', space=sflag, size = 0x8, scoped, tag = 'scoped memory for block_forward.1']
    %10 = vsyncpa [#allocation3], 0
    %s11 = scalar_lea.sflag [#allocation3], 1
    %12 = vsyncpa %s11, 0
    loop: start=0, step=1, limit=4
    $region2: #{block_forward.1} parent=1 // loop_pre_header
      _
    $region3: #{block_forward.1} parent=1 // loop_header
      %s14 = sphi 0, %s18
      %p15 = scmp.ge.s32.totalorder %s14, 4
      %s24 = sphi 0, %s26
      %s27 = sphi 0, %s24
      %s28 = sphi 0, %s27
      %s44 = sphi 0, %s28
      %s48 = sphi 0, %s48
      %s50 = sphi 0, %s48
      %s51 = sphi 0, %s50
      %s65 = sphi 0, %s51
      %s69 = sphi 0, %s69
      %s71 = sphi 0, %s69
      %s72 = sphi 0, %s71
      %s86 = sphi 0, %s72
      %s92 = sphi 0, %s94
      %s95 = sphi 0, %s92
      %s96 = sphi 0, %s95
      %s112 = sphi 0, %s96
      %s118 = sphi 0, %s120
      %s121 = sphi 0, %s118
      %s122 = sphi 0, %s121
      %s138 = sphi 0, %s122
      %s144 = sphi 0, %s146
      %s147 = sphi 0, %s144
      %s148 = sphi 0, %s147
      %s164 = sphi 0, %s148
    $region4: #{block_forward.1} parent=1 // loop_header_branch
      %17 = sbr.rel (%p15) target = $region8
    $region5: #{block_forward.1} parent=1 // loop_body
      %s19 = ssub.s32 %s14, 1
      %s20 = ssub.s32 %s14, 2
      %s21 = sadd.s32 %s14, 1
      %s22 = ssub.s32 %s14, %s21
      %p23 = scmp.eq.s32.totalorder %s22, 0
      %s25 = sadd.s32 %s24, 1
      %s26 = scalar_select %p23, %s24, %s25
      %p29 = pneg %p23
      %p30 = scmp.eq.s32.totalorder %s14, 1
      %p31 = por %p29, %p30
      %p32 = scmp.ne.s32.totalorder %s24, %s27
      %p33 = scmp.eq.s32.totalorder %s14, 0
      %p34 = por %p32, %p33
      %p35 = scmp.ne.s32.totalorder %s24, %s27
      %p36 = scmp.eq.s32.totalorder %s19, 1
      %p37 = por %p35, %p36
      %p38 = scmp.ne.s32.totalorder %s27, %s28
      %p39 = scmp.eq.s32.totalorder %s19, 0
      %p40 = por %p38, %p39
      %p41 = scmp.ne.s32.totalorder %s27, %s28
      %p42 = scmp.eq.s32.totalorder %s20, 1
      %p43 = por %p41, %p42
      %p45 = scmp.ne.s32.totalorder %s28, %s44
      %p46 = scmp.eq.s32.totalorder %s20, 0
      %p47 = por %p45, %p46
      %s49 = sadd.s32 %s48, 1
      %p52 = scmp.eq.s32.totalorder %s14, 1
      %p53 = scmp.ne.s32.totalorder %s48, %s50
      %p54 = scmp.eq.s32.totalorder %s14, 0
      %p55 = por %p53, %p54
      %p56 = scmp.ne.s32.totalorder %s48, %s50
      %p57 = scmp.eq.s32.totalorder %s19, 1
      %p58 = por %p56, %p57
      %p59 = scmp.ne.s32.totalorder %s50, %s51
      %p60 = scmp.eq.s32.totalorder %s19, 0
      %p61 = por %p59, %p60
      %p62 = scmp.ne.s32.totalorder %s50, %s51
      %p63 = scmp.eq.s32.totalorder %s20, 1
      %p64 = por %p62, %p63
      %p66 = scmp.ne.s32.totalorder %s51, %s65
      %p67 = scmp.eq.s32.totalorder %s20, 0
      %p68 = por %p66, %p67
      %s70 = sadd.s32 %s69, 1
      %p73 = scmp.eq.s32.totalorder %s14, 1
      %p74 = scmp.ne.s32.totalorder %s69, %s71
      %p75 = scmp.eq.s32.totalorder %s14, 0
      %p76 = por %p74, %p75
      %p77 = scmp.ne.s32.totalorder %s69, %s71
      %p78 = scmp.eq.s32.totalorder %s19, 1
      %p79 = por %p77, %p78
      %p80 = scmp.ne.s32.totalorder %s71, %s72
      %p81 = scmp.eq.s32.totalorder %s19, 0
      %p82 = por %p80, %p81
      %p83 = scmp.ne.s32.totalorder %s71, %s72
      %p84 = scmp.eq.s32.totalorder %s20, 1
      %p85 = por %p83, %p84
      %p87 = scmp.ne.s32.totalorder %s72, %s86
      %p88 = scmp.eq.s32.totalorder %s20, 0
      %p89 = por %p87, %p88
      %s90 = ssub.s32 %s14, %s21
      %p91 = scmp.eq.s32.totalorder %s90, 0
      %s93 = sadd.s32 %s92, 1
      %s94 = scalar_select %p91, %s92, %s93
      %p97 = pneg %p91
      %p98 = scmp.eq.s32.totalorder %s14, 1
      %p99 = por %p97, %p98
      %p100 = scmp.ne.s32.totalorder %s92, %s95
      %p101 = scmp.eq.s32.totalorder %s14, 0
      %p102 = por %p100, %p101
      %p103 = scmp.ne.s32.totalorder %s92, %s95
      %p104 = scmp.eq.s32.totalorder %s19, 1
      %p105 = por %p103, %p104
      %p106 = scmp.ne.s32.totalorder %s95, %s96
      %p107 = scmp.eq.s32.totalorder %s19, 0
      %p108 = por %p106, %p107
      %p109 = scmp.ne.s32.totalorder %s95, %s96
      %p110 = scmp.eq.s32.totalorder %s20, 1
      %p111 = por %p109, %p110
      %p113 = scmp.ne.s32.totalorder %s96, %s112
      %p114 = scmp.eq.s32.totalorder %s20, 0
      %p115 = por %p113, %p114
      %s116 = ssub.s32 %s14, %s21
      %p117 = scmp.eq.s32.totalorder %s116, 0
      %s119 = sadd.s32 %s118, 1
      %s120 = scalar_select %p117, %s118, %s119
      %p123 = pneg %p117
      %p124 = scmp.eq.s32.totalorder %s14, 1
      %p125 = por %p123, %p124
      %p126 = scmp.ne.s32.totalorder %s118, %s121
      %p127 = scmp.eq.s32.totalorder %s14, 0
      %p128 = por %p126, %p127
      %p129 = scmp.ne.s32.totalorder %s118, %s121
      %p130 = scmp.eq.s32.totalorder %s19, 1
      %p131 = por %p129, %p130
      %p132 = scmp.ne.s32.totalorder %s121, %s122
      %p133 = scmp.eq.s32.totalorder %s19, 0
      %p134 = por %p132, %p133
      %p135 = scmp.ne.s32.totalorder %s121, %s122
      %p136 = scmp.eq.s32.totalorder %s20, 1
      %p137 = por %p135, %p136
      %p139 = scmp.ne.s32.totalorder %s122, %s138
      %p140 = scmp.eq.s32.totalorder %s20, 0
      %p141 = por %p139, %p140
      %s142 = ssub.s32 %s14, %s21
      %p143 = scmp.eq.s32.totalorder %s142, 0
      %s145 = sadd.s32 %s144, 1
      %s146 = scalar_select %p143, %s144, %s145
      %p149 = pneg %p143
      %p150 = scmp.eq.s32.totalorder %s14, 1
      %p151 = por %p149, %p150
      %p152 = scmp.ne.s32.totalorder %s144, %s147
      %p153 = scmp.eq.s32.totalorder %s14, 0
      %p154 = por %p152, %p153
      %p155 = scmp.ne.s32.totalorder %s144, %s147
      %p156 = scmp.eq.s32.totalorder %s19, 1
      %p157 = por %p155, %p156
      %p158 = scmp.ne.s32.totalorder %s147, %s148
      %p159 = scmp.eq.s32.totalorder %s19, 0
      %p160 = por %p158, %p159
      %p161 = scmp.ne.s32.totalorder %s147, %s148
      %p162 = scmp.eq.s32.totalorder %s20, 1
      %p163 = por %p161, %p162
      %p165 = scmp.ne.s32.totalorder %s148, %s164
      %p166 = scmp.eq.s32.totalorder %s20, 0
      %p167 = por %p165, %p166
      %p168 = scmp.le.s32.totalorder 1, %s14
      %p169 = scmp.lt.s32.totalorder %s14, 3
      %p170 = pnand %p168, %p169
      %p171 = pneg %p170
      // Predicated region
      $region9: #{block_forward.1} parent=5 // pred_check
        _
      $region10: #{block_forward.1} parent=5 // pred_check_branch
        %173 = sbr.rel (%p170) target = $region12
      $region11: #{block_forward.1} parent=5 // pred_region
        %s174 = ssub.s32 %s14, 1
        // Predicated region
        $region13: #{block_forward.1} parent=11 // pred_check
          %p175 = pneg %p61
        $region14: #{block_forward.1} parent=11 // pred_check_branch
          %177 = sbr.rel (%p175) target = $region16
        $region15: #{block_forward.1} parent=11 // pred_region
          _
        $region16: #{block_forward.1} parent=11 // pred_fallthru
          _
        // Predicated region
        $region17: #{block_forward.1} parent=11 // pred_check
          %p178 = pneg %p82
        $region18: #{block_forward.1} parent=11 // pred_check_branch
          %180 = sbr.rel (%p178) target = $region20
        $region19: #{block_forward.1} parent=11 // pred_region
          _
        $region20: #{block_forward.1} parent=11 // pred_fallthru
          _
      $region12: #{block_forward.1} parent=5 // pred_fallthru
        _
      %p181 = scmp.lt.s32.totalorder %s14, 2
      // Predicated region
      $region21: #{block_forward.1} parent=5 // pred_check
        %p182 = pneg %p181
      $region22: #{block_forward.1} parent=5 // pred_check_branch
        %184 = sbr.rel (%p182) target = $region24
      $region23: #{block_forward.1} parent=5 // pred_region
        // Predicated region
        $region25: #{block_forward.1} parent=23 // pred_check
          %p185 = pneg %p34
        $region26: #{block_forward.1} parent=23 // pred_check_branch
          %187 = sbr.rel (%p185) target = $region28
        $region27: #{block_forward.1} parent=23 // pred_region
          %p188 = scmp.lt.s32.totalorder %s14, 1
          %s189 = scalar_select %p188, %s14, 1
          %s190 = smul.addr %s189, 16
          %s191 = smul.addr %s190, 8
          %s192 = scalar_lea.vmem %s0, %s191
        $region28: #{block_forward.1} parent=23 // pred_fallthru
          _
        // Predicated region
        $region29: #{block_forward.1} parent=23 // pred_check
          %p193 = pneg %p102
        $region30: #{block_forward.1} parent=23 // pred_check_branch
          %195 = sbr.rel (%p193) target = $region32
        $region31: #{block_forward.1} parent=23 // pred_region
          %p196 = scmp.lt.s32.totalorder %s14, 1
          %s197 = scalar_select %p196, %s14, 1
          %s198 = smul.addr %s197, 16
          %s199 = smul.addr %s198, 8
          %s200 = scalar_lea.vmem %s3, %s199
        $region32: #{block_forward.1} parent=23 // pred_fallthru
          _
        // Predicated region
        $region33: #{block_forward.1} parent=23 // pred_check
          %p201 = pneg %p128
        $region34: #{block_forward.1} parent=23 // pred_check_branch
          %203 = sbr.rel (%p201) target = $region36
        $region35: #{block_forward.1} parent=23 // pred_region
          %p204 = scmp.lt.s32.totalorder %s14, 1
          %s205 = scalar_select %p204, %s14, 1
          %s206 = smul.addr %s205, 16
          %s207 = smul.addr %s206, 8
          %s208 = scalar_lea.vmem %s4, %s207
        $region36: #{block_forward.1} parent=23 // pred_fallthru
          _
      $region24: #{block_forward.1} parent=5 // pred_fallthru
        _
      %p209 = scmp.le.s32.totalorder 1, %s14
      %p210 = scmp.lt.s32.totalorder %s14, 3
      %p211 = pnand %p209, %p210
      %p212 = pneg %p211
      // Predicated region
      $region37: #{block_forward.1} parent=5 // pred_check
        _
      $region38: #{block_forward.1} parent=5 // pred_check_branch
        %214 = sbr.rel (%p211) target = $region40
      $region39: #{block_forward.1} parent=5 // pred_region
        %s215 = ssub.s32 %s14, 1
        %p216 = scmp.lt.s32.totalorder %s19, 1
        %s217 = scalar_select %p216, %s19, 1
        %s218 = smul.addr %s217, 16
        %s219 = smul.addr %s218, 8
        %s220 = scalar_lea.vmem %s0, %s219
        %p221 = pneg %p40
        %p222 = pneg %p37
        %p223 = pneg %p61
        %p224 = pneg %p58
        %p225 = pneg %p82
        %p226 = pneg %p79
        %p227 = scmp.lt.s32.totalorder %s19, 1
        %s228 = scalar_select %p227, %s19, 1
        %s229 = smul.addr %s228, 16
        %s230 = smul.addr %s229, 8
        %s231 = scalar_lea.vmem %s3, %s230
        %p232 = pneg %p108
        %p233 = pneg %p105
        %p234 = scmp.lt.s32.totalorder %s19, 1
        %s235 = scalar_select %p234, %s19, 1
        %s236 = smul.addr %s235, 16
        %s237 = smul.addr %s236, 8
        %s238 = scalar_lea.vmem %s4, %s237
        %p239 = pneg %p134
        %p240 = pneg %p131
        %p241 = pneg %p160
        %p242 = pneg %p157
        %s243 = sand.u32 %s147, 1
        %s244 = scalar_lea.sflag [#allocation3], %s243
        %s245 = sand.u32 %s147, 1
        %s246 = smul.addr %s245, 128
        %s247 = scalar_lea.vmem [#allocation2], %s246
        %p248 = scmp.lt.s32.totalorder %s19, 1
        %s249 = scalar_select %p248, %s19, 1
        %s250 = smul.addr %s249, 16
        %s251 = smul.addr %s250, 8
        %s252 = scalar_lea.vmem %s0, %s251
        %p253 = scmp.lt.s32.totalorder %s19, 1
        %s254 = scalar_select %p253, %s19, 1
        %s255 = smul.addr %s254, 16
        %s256 = smul.addr %s255, 8
        %s257 = scalar_lea.vmem %s3, %s256
        %p258 = scmp.lt.s32.totalorder %s19, 1
        %s259 = scalar_select %p258, %s19, 1
        %s260 = smul.addr %s259, 16
        %s261 = smul.addr %s260, 8
        %s262 = scalar_lea.vmem %s4, %s261
        %v263 = vld [vmem:[%s1] sm:$0xff]
        %v264 = vld [vmem:[%s1 + $0x8] sm:$0xff]
        %v265 = vld [vmem:[%s1 + $0x10] sm:$0xff]
        %v266 = vld [vmem:[%s1 + $0x18] sm:$0xff]
        %v267 = vld [vmem:[%s1 + $0x20] sm:$0xff]
        %v268 = vld [vmem:[%s1 + $0x28] sm:$0xff]
        %v269 = vld [vmem:[%s1 + $0x30] sm:$0xff]
        %v270 = vld [vmem:[%s1 + $0x38] sm:$0xff]
        %v271 = vld [vmem:[%s1 + $0x40] sm:$0xff]
        %v272 = vld [vmem:[%s1 + $0x48] sm:$0xff]
        %v273 = vld [vmem:[%s1 + $0x50] sm:$0xff]
        %v274 = vld [vmem:[%s1 + $0x58] sm:$0xff]
        %v275 = vld [vmem:[%s1 + $0x60] sm:$0xff]
        %v276 = vld [vmem:[%s1 + $0x68] sm:$0xff]
        %v277 = vld [vmem:[%s1 + $0x70] sm:$0xff]
        %v278 = vld [vmem:[%s1 + $0x78] sm:$0xff]
        %v279 = vld [vmem:[%s1 + $0x80] sm:$0xff]
        %v280 = vld [vmem:[%s1 + $0x88] sm:$0xff]
        %v281 = vld [vmem:[%s1 + $0x90] sm:$0xff]
        %v282 = vld [vmem:[%s1 + $0x98] sm:$0xff]
        %v283 = vld [vmem:[%s1 + $0xa0] sm:$0xff]
        %v284 = vld [vmem:[%s1 + $0xa8] sm:$0xff]
        %v285 = vld [vmem:[%s1 + $0xb0] sm:$0xff]
        %v286 = vld [vmem:[%s1 + $0xb8] sm:$0xff]
        %v287 = vld [vmem:[%s1 + $0xc0] sm:$0xff]
        %v288 = vld [vmem:[%s1 + $0xc8] sm:$0xff]
        %v289 = vld [vmem:[%s1 + $0xd0] sm:$0xff]
        %v290 = vld [vmem:[%s1 + $0xd8] sm:$0xff]
        %v291 = vld [vmem:[%s1 + $0xe0] sm:$0xff]
        %v292 = vld [vmem:[%s1 + $0xe8] sm:$0xff]
        %v293 = vld [vmem:[%s1 + $0xf0] sm:$0xff]
        %v294 = vld [vmem:[%s1 + $0xf8] sm:$0xff]
        %v295 = vld [vmem:[%s1 + $0x100] sm:$0xff]
        %v296 = vld [vmem:[%s1 + $0x108] sm:$0xff]
        %v297 = vld [vmem:[%s1 + $0x110] sm:$0xff]
        %v298 = vld [vmem:[%s1 + $0x118] sm:$0xff]
        %v299 = vld [vmem:[%s1 + $0x120] sm:$0xff]
        %v300 = vld [vmem:[%s1 + $0x128] sm:$0xff]
        %v301 = vld [vmem:[%s1 + $0x130] sm:$0xff]
        %v302 = vld [vmem:[%s1 + $0x138] sm:$0xff]
        %v303 = vld [vmem:[%s1 + $0x140] sm:$0xff]
        %v304 = vld [vmem:[%s1 + $0x148] sm:$0xff]
        %v305 = vld [vmem:[%s1 + $0x150] sm:$0xff]
        %v306 = vld [vmem:[%s1 + $0x158] sm:$0xff]
        %v307 = vld [vmem:[%s1 + $0x160] sm:$0xff]
        %v308 = vld [vmem:[%s1 + $0x168] sm:$0xff]
        %v309 = vld [vmem:[%s1 + $0x170] sm:$0xff]
        %v310 = vld [vmem:[%s1 + $0x178] sm:$0xff]
        %vm311 = vcmask 523264
        %v312 = vsel %vm311, %v263, 0.0
        %v313 = vsel %vm311, %v279, 0.0
        %v314 = vadd.f32 %v312, %v313
        %v315 = vsel %vm311, %v295, 0.0
        %v316 = vadd.f32 %v314, %v315
        %v317 = vsel %vm311, %v264, 0.0
        %v318 = vsel %vm311, %v280, 0.0
        %v319 = vadd.f32 %v317, %v318
        %v320 = vsel %vm311, %v296, 0.0
        %v321 = vadd.f32 %v319, %v320
        %v322 = vsel %vm311, %v265, 0.0
        %v323 = vsel %vm311, %v281, 0.0
        %v324 = vadd.f32 %v322, %v323
        %v325 = vsel %vm311, %v297, 0.0
        %v326 = vadd.f32 %v324, %v325
        %v327 = vsel %vm311, %v266, 0.0
        %v328 = vsel %vm311, %v282, 0.0
        %v329 = vadd.f32 %v327, %v328
        %v330 = vsel %vm311, %v298, 0.0
        %v331 = vadd.f32 %v329, %v330
        %v332 = vsel %vm311, %v267, 0.0
        %v333 = vsel %vm311, %v283, 0.0
        %v334 = vadd.f32 %v332, %v333
        %v335 = vsel %vm311, %v299, 0.0
        %v336 = vadd.f32 %v334, %v335
        %v337 = vsel %vm311, %v268, 0.0
        %v338 = vsel %vm311, %v284, 0.0
        %v339 = vadd.f32 %v337, %v338
        %v340 = vsel %vm311, %v300, 0.0
        %v341 = vadd.f32 %v339, %v340
        %v342 = vsel %vm311, %v269, 0.0
        %v343 = vsel %vm311, %v285, 0.0
        %v344 = vadd.f32 %v342, %v343
        %v345 = vsel %vm311, %v301, 0.0
        %v346 = vadd.f32 %v344, %v345
        %v347 = vsel %vm311, %v270, 0.0
        %v348 = vsel %vm311, %v286, 0.0
        %v349 = vadd.f32 %v347, %v348
        %v350 = vsel %vm311, %v302, 0.0
        %v351 = vadd.f32 %v349, %v350
        %v352 = vsel %vm311, %v271, 0.0
        %v353 = vsel %vm311, %v287, 0.0
        %v354 = vadd.f32 %v352, %v353
        %v355 = vsel %vm311, %v303, 0.0
        %v356 = vadd.f32 %v354, %v355
        %v357 = vsel %vm311, %v272, 0.0
        %v358 = vsel %vm311, %v288, 0.0
        %v359 = vadd.f32 %v357, %v358
        %v360 = vsel %vm311, %v304, 0.0
        %v361 = vadd.f32 %v359, %v360
        %v362 = vsel %vm311, %v273, 0.0
        %v363 = vsel %vm311, %v289, 0.0
        %v364 = vadd.f32 %v362, %v363
        %v365 = vsel %vm311, %v305, 0.0
        %v366 = vadd.f32 %v364, %v365
        %v367 = vsel %vm311, %v274, 0.0
        %v368 = vsel %vm311, %v290, 0.0
        %v369 = vadd.f32 %v367, %v368
        %v370 = vsel %vm311, %v306, 0.0
        %v371 = vadd.f32 %v369, %v370
        %v372 = vsel %vm311, %v275, 0.0
        %v373 = vsel %vm311, %v291, 0.0
        %v374 = vadd.f32 %v372, %v373
        %v375 = vsel %vm311, %v307, 0.0
        %v376 = vadd.f32 %v374, %v375
        %v377 = vsel %vm311, %v276, 0.0
        %v378 = vsel %vm311, %v292, 0.0
        %v379 = vadd.f32 %v377, %v378
        %v380 = vsel %vm311, %v308, 0.0
        %v381 = vadd.f32 %v379, %v380
        %v382 = vsel %vm311, %v277, 0.0
        %v383 = vsel %vm311, %v293, 0.0
        %v384 = vadd.f32 %v382, %v383
        %v385 = vsel %vm311, %v309, 0.0
        %v386 = vadd.f32 %v384, %v385
        %v387 = vsel %vm311, %v278, 0.0
        %v388 = vsel %vm311, %v294, 0.0
        %v389 = vadd.f32 %v387, %v388
        %v390 = vsel %vm311, %v310, 0.0
        %v391 = vadd.f32 %v389, %v390
        %v392 = vrcp.pop 3.0
        %v393 = vmul.f32 %v316, %v392
        %v394 = vmul.f32 %v321, %v392
        %v395 = vmul.f32 %v326, %v392
        %v396 = vmul.f32 %v331, %v392
        %v397 = vmul.f32 %v336, %v392
        %v398 = vmul.f32 %v341, %v392
        %v399 = vmul.f32 %v346, %v392
        %v400 = vmul.f32 %v351, %v392
        %v401 = vmul.f32 %v356, %v392
        %v402 = vmul.f32 %v361, %v392
        %v403 = vmul.f32 %v366, %v392
        %v404 = vmul.f32 %v371, %v392
        %v405 = vmul.f32 %v376, %v392
        %v406 = vmul.f32 %v381, %v392
        %v407 = vmul.f32 %v386, %v392
        %v408 = vmul.f32 %v391, %v392
        %v409 = vsub.f32 %v263, %v393
        %v410 = vsub.f32 %v264, %v394
        %v411 = vsub.f32 %v265, %v395
        %v412 = vsub.f32 %v266, %v396
        %v413 = vsub.f32 %v267, %v397
        %v414 = vsub.f32 %v268, %v398
        %v415 = vsub.f32 %v269, %v399
        %v416 = vsub.f32 %v270, %v400
        %v417 = vsub.f32 %v271, %v401
        %v418 = vsub.f32 %v272, %v402
        %v419 = vsub.f32 %v273, %v403
        %v420 = vsub.f32 %v274, %v404
        %v421 = vsub.f32 %v275, %v405
        %v422 = vsub.f32 %v276, %v406
        %v423 = vsub.f32 %v277, %v407
        %v424 = vsub.f32 %v278, %v408
        %v425 = vsub.f32 %v279, %v393
        %v426 = vsub.f32 %v280, %v394
        %v427 = vsub.f32 %v281, %v395
        %v428 = vsub.f32 %v282, %v396
        %v429 = vsub.f32 %v283, %v397
        %v430 = vsub.f32 %v284, %v398
        %v431 = vsub.f32 %v285, %v399
        %v432 = vsub.f32 %v286, %v400
        %v433 = vsub.f32 %v287, %v401
        %v434 = vsub.f32 %v288, %v402
        %v435 = vsub.f32 %v289, %v403
        %v436 = vsub.f32 %v290, %v404
        %v437 = vsub.f32 %v291, %v405
        %v438 = vsub.f32 %v292, %v406
        %v439 = vsub.f32 %v293, %v407
        %v440 = vsub.f32 %v294, %v408
        %v441 = vsub.f32 %v295, %v393
        %v442 = vsub.f32 %v296, %v394
        %v443 = vsub.f32 %v297, %v395
        %v444 = vsub.f32 %v298, %v396
        %v445 = vsub.f32 %v299, %v397
        %v446 = vsub.f32 %v300, %v398
        %v447 = vsub.f32 %v301, %v399
        %v448 = vsub.f32 %v302, %v400
        %v449 = vsub.f32 %v303, %v401
        %v450 = vsub.f32 %v304, %v402
        %v451 = vsub.f32 %v305, %v403
        %v452 = vsub.f32 %v306, %v404
        %v453 = vsub.f32 %v307, %v405
        %v454 = vsub.f32 %v308, %v406
        %v455 = vsub.f32 %v309, %v407
        %v456 = vsub.f32 %v310, %v408
        %v457 = vmul.f32 %v409, %v409
        %v458 = vmul.f32 %v410, %v410
        %v459 = vmul.f32 %v411, %v411
        %v460 = vmul.f32 %v412, %v412
        %v461 = vmul.f32 %v413, %v413
        %v462 = vmul.f32 %v414, %v414
        %v463 = vmul.f32 %v415, %v415
        %v464 = vmul.f32 %v416, %v416
        %v465 = vmul.f32 %v417, %v417
        %v466 = vmul.f32 %v418, %v418
        %v467 = vmul.f32 %v419, %v419
        %v468 = vmul.f32 %v420, %v420
        %v469 = vmul.f32 %v421, %v421
        %v470 = vmul.f32 %v422, %v422
        %v471 = vmul.f32 %v423, %v423
        %v472 = vmul.f32 %v424, %v424
        %v473 = vmul.f32 %v425, %v425
        %v474 = vmul.f32 %v426, %v426
        %v475 = vmul.f32 %v427, %v427
        %v476 = vmul.f32 %v428, %v428
        %v477 = vmul.f32 %v429, %v429
        %v478 = vmul.f32 %v430, %v430
        %v479 = vmul.f32 %v431, %v431
        %v480 = vmul.f32 %v432, %v432
        %v481 = vmul.f32 %v433, %v433
        %v482 = vmul.f32 %v434, %v434
        %v483 = vmul.f32 %v435, %v435
        %v484 = vmul.f32 %v436, %v436
        %v485 = vmul.f32 %v437, %v437
        %v486 = vmul.f32 %v438, %v438
        %v487 = vmul.f32 %v439, %v439
        %v488 = vmul.f32 %v440, %v440
        %v489 = vmul.f32 %v441, %v441
        %v490 = vmul.f32 %v442, %v442
        %v491 = vmul.f32 %v443, %v443
        %v492 = vmul.f32 %v444, %v444
        %v493 = vmul.f32 %v445, %v445
        %v494 = vmul.f32 %v446, %v446
        %v495 = vmul.f32 %v447, %v447
        %v496 = vmul.f32 %v448, %v448
        %v497 = vmul.f32 %v449, %v449
        %v498 = vmul.f32 %v450, %v450
        %v499 = vmul.f32 %v451, %v451
        %v500 = vmul.f32 %v452, %v452
        %v501 = vmul.f32 %v453, %v453
        %v502 = vmul.f32 %v454, %v454
        %v503 = vmul.f32 %v455, %v455
        %v504 = vmul.f32 %v456, %v456
        %v505 = vsel %vm311, %v457, 0.0
        %v506 = vsel %vm311, %v473, 0.0
        %v507 = vadd.f32 %v505, %v506
        %v508 = vsel %vm311, %v489, 0.0
        %v509 = vadd.f32 %v507, %v508
        %v510 = vsel %vm311, %v458, 0.0
        %v511 = vsel %vm311, %v474, 0.0
        %v512 = vadd.f32 %v510, %v511
        %v513 = vsel %vm311, %v490, 0.0
        %v514 = vadd.f32 %v512, %v513
        %v515 = vsel %vm311, %v459, 0.0
        %v516 = vsel %vm311, %v475, 0.0
        %v517 = vadd.f32 %v515, %v516
        %v518 = vsel %vm311, %v491, 0.0
        %v519 = vadd.f32 %v517, %v518
        %v520 = vsel %vm311, %v460, 0.0
        %v521 = vsel %vm311, %v476, 0.0
        %v522 = vadd.f32 %v520, %v521
        %v523 = vsel %vm311, %v492, 0.0
        %v524 = vadd.f32 %v522, %v523
        %v525 = vsel %vm311, %v461, 0.0
        %v526 = vsel %vm311, %v477, 0.0
        %v527 = vadd.f32 %v525, %v526
        %v528 = vsel %vm311, %v493, 0.0
        %v529 = vadd.f32 %v527, %v528
        %v530 = vsel %vm311, %v462, 0.0
        %v531 = vsel %vm311, %v478, 0.0
        %v532 = vadd.f32 %v530, %v531
        %v533 = vsel %vm311, %v494, 0.0
        %v534 = vadd.f32 %v532, %v533
        %v535 = vsel %vm311, %v463, 0.0
        %v536 = vsel %vm311, %v479, 0.0
        %v537 = vadd.f32 %v535, %v536
        %v538 = vsel %vm311, %v495, 0.0
        %v539 = vadd.f32 %v537, %v538
        %v540 = vsel %vm311, %v464, 0.0
        %v541 = vsel %vm311, %v480, 0.0
        %v542 = vadd.f32 %v540, %v541
        %v543 = vsel %vm311, %v496, 0.0
        %v544 = vadd.f32 %v542, %v543
        %v545 = vsel %vm311, %v465, 0.0
        %v546 = vsel %vm311, %v481, 0.0
        %v547 = vadd.f32 %v545, %v546
        %v548 = vsel %vm311, %v497, 0.0
        %v549 = vadd.f32 %v547, %v548
        %v550 = vsel %vm311, %v466, 0.0
        %v551 = vsel %vm311, %v482, 0.0
        %v552 = vadd.f32 %v550, %v551
        %v553 = vsel %vm311, %v498, 0.0
        %v554 = vadd.f32 %v552, %v553
        %v555 = vsel %vm311, %v467, 0.0
        %v556 = vsel %vm311, %v483, 0.0
        %v557 = vadd.f32 %v555, %v556
        %v558 = vsel %vm311, %v499, 0.0
        %v559 = vadd.f32 %v557, %v558
        %v560 = vsel %vm311, %v468, 0.0
        %v561 = vsel %vm311, %v484, 0.0
        %v562 = vadd.f32 %v560, %v561
        %v563 = vsel %vm311, %v500, 0.0
        %v564 = vadd.f32 %v562, %v563
        %v565 = vsel %vm311, %v469, 0.0
        %v566 = vsel %vm311, %v485, 0.0
        %v567 = vadd.f32 %v565, %v566
        %v568 = vsel %vm311, %v501, 0.0
        %v569 = vadd.f32 %v567, %v568
        %v570 = vsel %vm311, %v470, 0.0
        %v571 = vsel %vm311, %v486, 0.0
        %v572 = vadd.f32 %v570, %v571
        %v573 = vsel %vm311, %v502, 0.0
        %v574 = vadd.f32 %v572, %v573
        %v575 = vsel %vm311, %v471, 0.0
        %v576 = vsel %vm311, %v487, 0.0
        %v577 = vadd.f32 %v575, %v576
        %v578 = vsel %vm311, %v503, 0.0
        %v579 = vadd.f32 %v577, %v578
        %v580 = vsel %vm311, %v472, 0.0
        %v581 = vsel %vm311, %v488, 0.0
        %v582 = vadd.f32 %v580, %v581
        %v583 = vsel %vm311, %v504, 0.0
        %v584 = vadd.f32 %v582, %v583
        %v585 = vmul.f32 %v509, %v392
        %v586 = vmul.f32 %v514, %v392
        %v587 = vmul.f32 %v519, %v392
        %v588 = vmul.f32 %v524, %v392
        %v589 = vmul.f32 %v529, %v392
        %v590 = vmul.f32 %v534, %v392
        %v591 = vmul.f32 %v539, %v392
        %v592 = vmul.f32 %v544, %v392
        %v593 = vmul.f32 %v549, %v392
        %v594 = vmul.f32 %v554, %v392
        %v595 = vmul.f32 %v559, %v392
        %v596 = vmul.f32 %v564, %v392
        %v597 = vmul.f32 %v569, %v392
        %v598 = vmul.f32 %v574, %v392
        %v599 = vmul.f32 %v579, %v392
        %v600 = vmul.f32 %v584, %v392
        %v601 = vadd.f32 %v585, 1e-05
        %v602 = vadd.f32 %v586, 1e-05
        %v603 = vadd.f32 %v587, 1e-05
        %v604 = vadd.f32 %v588, 1e-05
        %v605 = vadd.f32 %v589, 1e-05
        %v606 = vadd.f32 %v590, 1e-05
        %v607 = vadd.f32 %v591, 1e-05
        %v608 = vadd.f32 %v592, 1e-05
        %v609 = vadd.f32 %v593, 1e-05
        %v610 = vadd.f32 %v594, 1e-05
        %v611 = vadd.f32 %v595, 1e-05
        %v612 = vadd.f32 %v596, 1e-05
        %v613 = vadd.f32 %v597, 1e-05
        %v614 = vadd.f32 %v598, 1e-05
        %v615 = vadd.f32 %v599, 1e-05
        %v616 = vadd.f32 %v600, 1e-05
        %v617 = vrsqrt.pop %v601
        %v618 = vrsqrt.pop %v602
        %v619 = vrsqrt.pop %v603
        %v620 = vrsqrt.pop %v604
        %v621 = vrsqrt.pop %v605
        %v622 = vrsqrt.pop %v606
        %v623 = vrsqrt.pop %v607
        %v624 = vrsqrt.pop %v608
        %v625 = vrsqrt.pop %v609
        %v626 = vrsqrt.pop %v610
        %v627 = vrsqrt.pop %v611
        %v628 = vrsqrt.pop %v612
        %v629 = vrsqrt.pop %v613
        %v630 = vrsqrt.pop %v614
        %v631 = vrsqrt.pop %v615
        %v632 = vrsqrt.pop %v616
        %v633 = vmul.f32 %v409, %v617
        %v634 = vmul.f32 %v410, %v618
        %v635 = vmul.f32 %v411, %v619
        %v636 = vmul.f32 %v412, %v620
        %v637 = vmul.f32 %v413, %v621
        %v638 = vmul.f32 %v414, %v622
        %v639 = vmul.f32 %v415, %v623
        %v640 = vmul.f32 %v416, %v624
        %v641 = vmul.f32 %v417, %v625
        %v642 = vmul.f32 %v418, %v626
        %v643 = vmul.f32 %v419, %v627
        %v644 = vmul.f32 %v420, %v628
        %v645 = vmul.f32 %v421, %v629
        %v646 = vmul.f32 %v422, %v630
        %v647 = vmul.f32 %v423, %v631
        %v648 = vmul.f32 %v424, %v632
        %v649 = vmul.f32 %v425, %v617
        %v650 = vmul.f32 %v426, %v618
        %v651 = vmul.f32 %v427, %v619
        %v652 = vmul.f32 %v428, %v620
        %v653 = vmul.f32 %v429, %v621
        %v654 = vmul.f32 %v430, %v622
        %v655 = vmul.f32 %v431, %v623
        %v656 = vmul.f32 %v432, %v624
        %v657 = vmul.f32 %v433, %v625
        %v658 = vmul.f32 %v434, %v626
        %v659 = vmul.f32 %v435, %v627
        %v660 = vmul.f32 %v436, %v628
        %v661 = vmul.f32 %v437, %v629
        %v662 = vmul.f32 %v438, %v630
        %v663 = vmul.f32 %v439, %v631
        %v664 = vmul.f32 %v440, %v632
        %v665 = vmul.f32 %v441, %v617
        %v666 = vmul.f32 %v442, %v618
        %v667 = vmul.f32 %v443, %v619
        %v668 = vmul.f32 %v444, %v620
        %v669 = vmul.f32 %v445, %v621
        %v670 = vmul.f32 %v446, %v622
        %v671 = vmul.f32 %v447, %v623
        %v672 = vmul.f32 %v448, %v624
        %v673 = vmul.f32 %v449, %v625
        %v674 = vmul.f32 %v450, %v626
        %v675 = vmul.f32 %v451, %v627
        %v676 = vmul.f32 %v452, %v628
        %v677 = vmul.f32 %v453, %v629
        %v678 = vmul.f32 %v454, %v630
        %v679 = vmul.f32 %v455, %v631
        %v680 = vmul.f32 %v456, %v632
        %v681 = vld [vmem:[%s252] sm:$0xff]
        %v682 = vld [vmem:[%s252 + $0x8] sm:$0xff]
        %v683 = vld [vmem:[%s252 + $0x10] sm:$0xff]
        %v684 = vld [vmem:[%s252 + $0x18] sm:$0xff]
        %v685 = vld [vmem:[%s252 + $0x20] sm:$0xff]
        %v686 = vld [vmem:[%s252 + $0x28] sm:$0xff]
        %v687 = vld [vmem:[%s252 + $0x30] sm:$0xff]
        %v688 = vld [vmem:[%s252 + $0x38] sm:$0xff]
        %v689 = vld [vmem:[%s252 + $0x40] sm:$0xff]
        %v690 = vld [vmem:[%s252 + $0x48] sm:$0xff]
        %v691 = vld [vmem:[%s252 + $0x50] sm:$0xff]
        %v692 = vld [vmem:[%s252 + $0x58] sm:$0xff]
        %v693 = vld [vmem:[%s252 + $0x60] sm:$0xff]
        %v694 = vld [vmem:[%s252 + $0x68] sm:$0xff]
        %v695 = vld [vmem:[%s252 + $0x70] sm:$0xff]
        %v696 = vld [vmem:[%s252 + $0x78] sm:$0xff]
        %713 = vrot.lane.b32.xlu0 %v681, 127
        %v714 = vpop.permute.xlu0 %713
        %715 = vrot.lane.b32.xlu0 %v682, 127
        %v716 = vpop.permute.xlu0 %715
        %717 = vrot.lane.b32.xlu0 %v683, 127
        %v718 = vpop.permute.xlu0 %717
        %719 = vrot.lane.b32.xlu0 %v684, 127
        %v720 = vpop.permute.xlu0 %719
        %721 = vrot.lane.b32.xlu0 %v685, 127
        %v722 = vpop.permute.xlu0 %721
        %723 = vrot.lane.b32.xlu0 %v686, 127
        %v724 = vpop.permute.xlu0 %723
        %725 = vrot.lane.b32.xlu0 %v687, 127
        %v726 = vpop.permute.xlu0 %725
        %727 = vrot.lane.b32.xlu0 %v688, 127
        %v728 = vpop.permute.xlu0 %727
        %729 = vrot.lane.b32.xlu0 %v689, 127
        %v730 = vpop.permute.xlu0 %729
        %731 = vrot.lane.b32.xlu0 %v690, 127
        %v732 = vpop.permute.xlu0 %731
        %733 = vrot.lane.b32.xlu0 %v691, 127
        %v734 = vpop.permute.xlu0 %733
        %735 = vrot.lane.b32.xlu0 %v692, 127
        %v736 = vpop.permute.xlu0 %735
        %737 = vrot.lane.b32.xlu0 %v693, 127
        %v738 = vpop.permute.xlu0 %737
        %739 = vrot.lane.b32.xlu0 %v694, 127
        %v740 = vpop.permute.xlu0 %739
        %741 = vrot.lane.b32.xlu0 %v695, 127
        %v742 = vpop.permute.xlu0 %741
        %743 = vrot.lane.b32.xlu0 %v696, 127
        %v744 = vpop.permute.xlu0 %743
        %vm745 = vcmask 1039360
        %v746 = vsel %vm745, %v714, %v716
        %v747 = vsel %vm745, %v718, %v720
        %v748 = vsel %vm745, %v722, %v724
        %v749 = vsel %vm745, %v726, %v728
        %v750 = vsel %vm745, %v730, %v732
        %v751 = vsel %vm745, %v734, %v736
        %v752 = vsel %vm745, %v738, %v740
        %v753 = vsel %vm745, %v742, %v744
        %v763 = vsel %vm311, %v649, 0
        %v766 = vsel %vm311, %v650, 0
        %v769 = vsel %vm311, %v651, 0
        %v772 = vsel %vm311, %v652, 0
        %v775 = vsel %vm311, %v653, 0
        %v778 = vsel %vm311, %v654, 0
        %v781 = vsel %vm311, %v655, 0
        %v784 = vsel %vm311, %v656, 0
        %v787 = vsel %vm311, %v657, 0
        %v790 = vsel %vm311, %v658, 0
        %v793 = vsel %vm311, %v659, 0
        %v796 = vsel %vm311, %v660, 0
        %v799 = vsel %vm311, %v661, 0
        %v802 = vsel %vm311, %v662, 0
        %v805 = vsel %vm311, %v663, 0
        %v808 = vsel %vm311, %v664, 0
        %810 = vmatprep.subr.mxu0 0.0
        %811 = vmatpush1.msra.mxu0 %v746
        %812 = vmatprep.subr.mxu0 0.0
        %813 = vmatpush1.msra.mxu0 %v747
        %814 = vmatprep.subr.mxu0 0.0
        %815 = vmatpush1.msra.mxu0 %v748
        %816 = vmatprep.subr.mxu0 0.0
        %817 = vmatpush1.msra.mxu0 %v749
        %818 = vmatprep.subr.mxu0 0.0
        %819 = vmatpush1.msra.mxu0 %v750
        %820 = vmatprep.subr.mxu0 0.0
        %821 = vmatpush1.msra.mxu0 %v751
        %822 = vmatprep.subr.mxu0 0.0
        %823 = vmatpush1.msra.mxu0 %v752
        %824 = vmatprep.subr.mxu0 0.0
        %825 = vmatpush1.msra.mxu0 %v753
        %826 = vmatprep.subr.mxu0 0.0
        %827 = vmatpush1.msra.mxu0 0.0
        %828 = vmatprep.subr.mxu0 0.0
        %829 = vmatpush1.msra.mxu0 0.0
        %830 = vmatprep.subr.mxu0 0.0
        %831 = vmatpush1.msra.mxu0 0.0
        %832 = vmatprep.subr.mxu0 0.0
        %833 = vmatpush1.msra.mxu0 0.0
        %834 = vmatprep.subr.mxu0 0.0
        %835 = vmatpush1.msra.mxu0 0.0
        %836 = vmatprep.subr.mxu0 0.0
        %837 = vmatpush1.msra.mxu0 0.0
        %838 = vmatprep.subr.mxu0 0.0
        %839 = vmatpush1.msra.mxu0 0.0
        %840 = vmatprep.subr.mxu0 0.0
        %841 = vmatpush1.msra.mxu0 0.0
        %842 = vmatprep.subr.mxu0 0.0
        %843 = vmatpush1.msra.mxu0 0.0
        %844 = vmatprep.subr.mxu0 0.0
        %845 = vmatpush1.msra.mxu0 0.0
        %846 = vmatprep.subr.mxu0 0.0
        %847 = vmatpush1.msra.mxu0 0.0
        %848 = vmatprep.subr.mxu0 0.0
        %849 = vmatpush1.msra.mxu0 0.0
        %850 = vmatprep.subr.mxu0 0.0
        %851 = vmatpush1.msra.mxu0 0.0
        %852 = vmatprep.subr.mxu0 0.0
        %853 = vmatpush1.msra.mxu0 0.0
        %854 = vmatprep.subr.mxu0 0.0
        %855 = vmatpush1.msra.mxu0 0.0
        %856 = vmatprep.subr.mxu0 0.0
        %857 = vmatpush1.msra.mxu0 0.0
        %858 = vmatprep.subr.mxu0 0.0
        %859 = vmatpush1.msra.mxu0 0.0
        %860 = vmatprep.subr.mxu0 0.0
        %861 = vmatpush1.msra.mxu0 0.0
        %862 = vmatprep.subr.mxu0 0.0
        %863 = vmatpush1.msra.mxu0 0.0
        %864 = vmatprep.subr.mxu0 0.0
        %865 = vmatpush1.msra.mxu0 0.0
        %866 = vmatprep.subr.mxu0 0.0
        %867 = vmatpush1.msra.mxu0 0.0
        %868 = vmatprep.subr.mxu0 0.0
        %869 = vmatpush1.msra.mxu0 0.0
        %870 = vmatprep.subr.mxu0 0.0
        %871 = vmatpush1.msra.mxu0 0.0
        %872 = vmatprep.subr.mxu0 0.0
        %873 = vmatpush1.msra.mxu0 0.0
        %874 = vmatprep.mubr.f32.mxu0 0.0
        %875 = vmatmul.mubr.f32.gmra.mrb[0].mxu0 %v763
        %v876 = vpop.f32.mrb[0].mxu0
        %v877 = vadd.f32 0.0, %v876
        %v878 = vpop.f32.mrb[0].mxu0
        %879 = vmatprep.mubr.f32.mxu0 0.0
        %880 = vmatmul.mubr.f32.gmra.mrb[0].mxu0 %v766
        %v881 = vpop.f32.mrb[0].mxu0
        %v882 = vadd.f32 0.0, %v881
        %v883 = vpop.f32.mrb[0].mxu0
        %884 = vmatprep.mubr.f32.mxu0 0.0
        %885 = vmatmul.mubr.f32.gmra.mrb[0].mxu0 %v769
        %v886 = vpop.f32.mrb[0].mxu0
        %v887 = vadd.f32 0.0, %v886
        %v888 = vpop.f32.mrb[0].mxu0
        %889 = vmatprep.mubr.f32.mxu0 0.0
        %890 = vmatmul.mubr.f32.gmra.mrb[0].mxu0 %v772
        %v891 = vpop.f32.mrb[0].mxu0
        %v892 = vadd.f32 0.0, %v891
        %v893 = vpop.f32.mrb[0].mxu0
        %894 = vmatprep.mubr.f32.mxu0 0.0
        %895 = vmatmul.mubr.f32.gmra.mrb[0].mxu0 %v775
        %v896 = vpop.f32.mrb[0].mxu0
        %v897 = vadd.f32 0.0, %v896
        %v898 = vpop.f32.mrb[0].mxu0
        %899 = vmatprep.mubr.f32.mxu0 0.0
        %900 = vmatmul.mubr.f32.gmra.mrb[0].mxu0 %v778
        %v901 = vpop.f32.mrb[0].mxu0
        %v902 = vadd.f32 0.0, %v901
        %v903 = vpop.f32.mrb[0].mxu0
        %904 = vmatprep.mubr.f32.mxu0 0.0
        %905 = vmatmul.mubr.f32.gmra.mrb[0].mxu0 %v781
        %v906 = vpop.f32.mrb[0].mxu0
        %v907 = vadd.f32 0.0, %v906
        %v908 = vpop.f32.mrb[0].mxu0
        %909 = vmatprep.mubr.f32.mxu0 0.0
        %910 = vmatmul.mubr.f32.gmra.mrb[0].mxu0 %v784
        %v911 = vpop.f32.mrb[0].mxu0
        %v912 = vadd.f32 0.0, %v911
        %v913 = vpop.f32.mrb[0].mxu0
        %914 = vmatprep.mubr.f32.mxu0 0.0
        %915 = vmatmul.mubr.f32.gmra.mrb[0].mxu0 %v787
        %v916 = vpop.f32.mrb[0].mxu0
        %v917 = vadd.f32 0.0, %v916
        %v918 = vpop.f32.mrb[0].mxu0
        %919 = vmatprep.mubr.f32.mxu0 0.0
        %920 = vmatmul.mubr.f32.gmra.mrb[0].mxu0 %v790
        %v921 = vpop.f32.mrb[0].mxu0
        %v922 = vadd.f32 0.0, %v921
        %v923 = vpop.f32.mrb[0].mxu0
        %924 = vmatprep.mubr.f32.mxu0 0.0
        %925 = vmatmul.mubr.f32.gmra.mrb[0].mxu0 %v793
        %v926 = vpop.f32.mrb[0].mxu0
        %v927 = vadd.f32 0.0, %v926
        %v928 = vpop.f32.mrb[0].mxu0
        %929 = vmatprep.mubr.f32.mxu0 0.0
        %930 = vmatmul.mubr.f32.gmra.mrb[0].mxu0 %v796
        %v931 = vpop.f32.mrb[0].mxu0
        %v932 = vadd.f32 0.0, %v931
        %v933 = vpop.f32.mrb[0].mxu0
        %934 = vmatprep.mubr.f32.mxu0 0.0
        %935 = vmatmul.mubr.f32.gmra.mrb[0].mxu0 %v799
        %v936 = vpop.f32.mrb[0].mxu0
        %v937 = vadd.f32 0.0, %v936
        %v938 = vpop.f32.mrb[0].mxu0
        %939 = vmatprep.mubr.f32.mxu0 0.0
        %940 = vmatmul.mubr.f32.gmra.mrb[0].mxu0 %v802
        %v941 = vpop.f32.mrb[0].mxu0
        %v942 = vadd.f32 0.0, %v941
        %v943 = vpop.f32.mrb[0].mxu0
        %944 = vmatprep.mubr.f32.mxu0 0.0
        %945 = vmatmul.mubr.f32.gmra.mrb[0].mxu0 %v805
        %v946 = vpop.f32.mrb[0].mxu0
        %v947 = vadd.f32 0.0, %v946
        %v948 = vpop.f32.mrb[0].mxu0
        %949 = vmatprep.mubr.f32.mxu0 0.0
        %950 = vmatmul.mubr.f32.gmra.mrb[0].mxu0 %v808
        %v951 = vpop.f32.mrb[0].mxu0
        %v952 = vadd.f32 0.0, %v951
        %v953 = vpop.f32.mrb[0].mxu0
        %954 = vdwg.mxu0
        %v956 = vsel %vm311, %v633, 0
        %v959 = vsel %vm311, %v634, 0
        %v962 = vsel %vm311, %v635, 0
        %v965 = vsel %vm311, %v636, 0
        %v968 = vsel %vm311, %v637, 0
        %v971 = vsel %vm311, %v638, 0
        %v974 = vsel %vm311, %v639, 0
        %v977 = vsel %vm311, %v640, 0
        %v980 = vsel %vm311, %v641, 0
        %v983 = vsel %vm311, %v642, 0
        %v986 = vsel %vm311, %v643, 0
        %v989 = vsel %vm311, %v644, 0
        %v992 = vsel %vm311, %v645, 0
        %v995 = vsel %vm311, %v646, 0
        %v998 = vsel %vm311, %v647, 0
        %v1001 = vsel %vm311, %v648, 0
        %1003 = vmatprep.subr.mxu0 0.0
        %1004 = vmatpush1.msra.mxu0 %v681
        %1005 = vmatprep.subr.mxu0 0.0
        %1006 = vmatpush1.msra.mxu0 %v683
        %1007 = vmatprep.subr.mxu0 0.0
        %1008 = vmatpush1.msra.mxu0 %v685
        %1009 = vmatprep.subr.mxu0 0.0
        %1010 = vmatpush1.msra.mxu0 %v687
        %1011 = vmatprep.subr.mxu0 0.0
        %1012 = vmatpush1.msra.mxu0 %v689
        %1013 = vmatprep.subr.mxu0 0.0
        %1014 = vmatpush1.msra.mxu0 %v691
        %1015 = vmatprep.subr.mxu0 0.0
        %1016 = vmatpush1.msra.mxu0 %v693
        %1017 = vmatprep.subr.mxu0 0.0
        %1018 = vmatpush1.msra.mxu0 %v695
        %1019 = vmatprep.subr.mxu0 0.0
        %1020 = vmatpush1.msra.mxu0 0.0
        %1021 = vmatprep.subr.mxu0 0.0
        %1022 = vmatpush1.msra.mxu0 0.0
        %1023 = vmatprep.subr.mxu0 0.0
        %1024 = vmatpush1.msra.mxu0 0.0
        %1025 = vmatprep.subr.mxu0 0.0
        %1026 = vmatpush1.msra.mxu0 0.0
        %1027 = vmatprep.subr.mxu0 0.0
        %1028 = vmatpush1.msra.mxu0 0.0
        %1029 = vmatprep.subr.mxu0 0.0
        %1030 = vmatpush1.msra.mxu0 0.0
        %1031 = vmatprep.subr.mxu0 0.0
        %1032 = vmatpush1.msra.mxu0 0.0
        %1033 = vmatprep.subr.mxu0 0.0
        %1034 = vmatpush1.msra.mxu0 0.0
        %1035 = vmatprep.subr.mxu0 0.0
        %1036 = vmatpush1.msra.mxu0 0.0
        %1037 = vmatprep.subr.mxu0 0.0
        %1038 = vmatpush1.msra.mxu0 0.0
        %1039 = vmatprep.subr.mxu0 0.0
        %1040 = vmatpush1.msra.mxu0 0.0
        %1041 = vmatprep.subr.mxu0 0.0
        %1042 = vmatpush1.msra.mxu0 0.0
        %1043 = vmatprep.subr.mxu0 0.0
        %1044 = vmatpush1.msra.mxu0 0.0
        %1045 = vmatprep.subr.mxu0 0.0
        %1046 = vmatpush1.msra.mxu0 0.0
        %1047 = vmatprep.subr.mxu0 0.0
        %1048 = vmatpush1.msra.mxu0 0.0
        %1049 = vmatprep.subr.mxu0 0.0
        %1050 = vmatpush1.msra.mxu0 0.0
        %1051 = vmatprep.subr.mxu0 0.0
        %1052 = vmatpush1.msra.mxu0 0.0
        %1053 = vmatprep.subr.mxu0 0.0
        %1054 = vmatpush1.msra.mxu0 0.0
        %1055 = vmatprep.subr.mxu0 0.0
        %1056 = vmatpush1.msra.mxu0 0.0
        %1057 = vmatprep.subr.mxu0 0.0
        %1058 = vmatpush1.msra.mxu0 0.0
        %1059 = vmatprep.subr.mxu0 0.0
        %1060 = vmatpush1.msra.mxu0 0.0
        %1061 = vmatprep.subr.mxu0 0.0
        %1062 = vmatpush1.msra.mxu0 0.0
        %1063 = vmatprep.subr.mxu0 0.0
        %1064 = vmatpush1.msra.mxu0 0.0
        %1065 = vmatprep.subr.mxu0 0.0
        %1066 = vmatpush1.msra.mxu0 0.0
        %1067 = vmatprep.mubr.f32.mxu0 0.0
        %1068 = vmatmul.mubr.f32.gmra.mrb[0].mxu0 %v956
        %v1069 = vpop.f32.mrb[0].mxu0
        %v1070 = vadd.f32 %v877, %v1069
        %v1071 = vpop.f32.mrb[0].mxu0
        %1072 = vmatprep.mubr.f32.mxu0 0.0
        %1073 = vmatmul.mubr.f32.gmra.mrb[0].mxu0 %v959
        %v1074 = vpop.f32.mrb[0].mxu0
        %v1075 = vadd.f32 %v882, %v1074
        %v1076 = vpop.f32.mrb[0].mxu0
        %1077 = vmatprep.mubr.f32.mxu0 0.0
        %1078 = vmatmul.mubr.f32.gmra.mrb[0].mxu0 %v962
        %v1079 = vpop.f32.mrb[0].mxu0
        %v1080 = vadd.f32 %v887, %v1079
        %v1081 = vpop.f32.mrb[0].mxu0
        %1082 = vmatprep.mubr.f32.mxu0 0.0
        %1083 = vmatmul.mubr.f32.gmra.mrb[0].mxu0 %v965
        %v1084 = vpop.f32.mrb[0].mxu0
        %v1085 = vadd.f32 %v892, %v1084
        %v1086 = vpop.f32.mrb[0].mxu0
        %1087 = vmatprep.mubr.f32.mxu0 0.0
        %1088 = vmatmul.mubr.f32.gmra.mrb[0].mxu0 %v968
        %v1089 = vpop.f32.mrb[0].mxu0
        %v1090 = vadd.f32 %v897, %v1089
        %v1091 = vpop.f32.mrb[0].mxu0
        %1092 = vmatprep.mubr.f32.mxu0 0.0
        %1093 = vmatmul.mubr.f32.gmra.mrb[0].mxu0 %v971
        %v1094 = vpop.f32.mrb[0].mxu0
        %v1095 = vadd.f32 %v902, %v1094
        %v1096 = vpop.f32.mrb[0].mxu0
        %1097 = vmatprep.mubr.f32.mxu0 0.0
        %1098 = vmatmul.mubr.f32.gmra.mrb[0].mxu0 %v974
        %v1099 = vpop.f32.mrb[0].mxu0
        %v1100 = vadd.f32 %v907, %v1099
        %v1101 = vpop.f32.mrb[0].mxu0
        %1102 = vmatprep.mubr.f32.mxu0 0.0
        %1103 = vmatmul.mubr.f32.gmra.mrb[0].mxu0 %v977
        %v1104 = vpop.f32.mrb[0].mxu0
        %v1105 = vadd.f32 %v912, %v1104
        %v1106 = vpop.f32.mrb[0].mxu0
        %1107 = vmatprep.mubr.f32.mxu0 0.0
        %1108 = vmatmul.mubr.f32.gmra.mrb[0].mxu0 %v980
        %v1109 = vpop.f32.mrb[0].mxu0
        %v1110 = vadd.f32 %v917, %v1109
        %v1111 = vpop.f32.mrb[0].mxu0
        %1112 = vmatprep.mubr.f32.mxu0 0.0
        %1113 = vmatmul.mubr.f32.gmra.mrb[0].mxu0 %v983
        %v1114 = vpop.f32.mrb[0].mxu0
        %v1115 = vadd.f32 %v922, %v1114
        %v1116 = vpop.f32.mrb[0].mxu0
        %1117 = vmatprep.mubr.f32.mxu0 0.0
        %1118 = vmatmul.mubr.f32.gmra.mrb[0].mxu0 %v986
        %v1119 = vpop.f32.mrb[0].mxu0
        %v1120 = vadd.f32 %v927, %v1119
        %v1121 = vpop.f32.mrb[0].mxu0
        %1122 = vmatprep.mubr.f32.mxu0 0.0
        %1123 = vmatmul.mubr.f32.gmra.mrb[0].mxu0 %v989
        %v1124 = vpop.f32.mrb[0].mxu0
        %v1125 = vadd.f32 %v932, %v1124
        %v1126 = vpop.f32.mrb[0].mxu0
        %1127 = vmatprep.mubr.f32.mxu0 0.0
        %1128 = vmatmul.mubr.f32.gmra.mrb[0].mxu0 %v992
        %v1129 = vpop.f32.mrb[0].mxu0
        %v1130 = vadd.f32 %v937, %v1129
        %v1131 = vpop.f32.mrb[0].mxu0
        %1132 = vmatprep.mubr.f32.mxu0 0.0
        %1133 = vmatmul.mubr.f32.gmra.mrb[0].mxu0 %v995
        %v1134 = vpop.f32.mrb[0].mxu0
        %v1135 = vadd.f32 %v942, %v1134
        %v1136 = vpop.f32.mrb[0].mxu0
        %1137 = vmatprep.mubr.f32.mxu0 0.0
        %1138 = vmatmul.mubr.f32.gmra.mrb[0].mxu0 %v998
        %v1139 = vpop.f32.mrb[0].mxu0
        %v1140 = vadd.f32 %v947, %v1139
        %v1141 = vpop.f32.mrb[0].mxu0
        %1142 = vmatprep.mubr.f32.mxu0 0.0
        %1143 = vmatmul.mubr.f32.gmra.mrb[0].mxu0 %v1001
        %v1144 = vpop.f32.mrb[0].mxu0
        %v1145 = vadd.f32 %v952, %v1144
        %v1146 = vpop.f32.mrb[0].mxu0
        %1147 = vdwg.mxu0
        %1148 = vrot.lane.b32.xlu0 %v681, 126
        %v1149 = vpop.permute.xlu0 %1148
        %1150 = vrot.lane.b32.xlu0 %v682, 126
        %v1151 = vpop.permute.xlu0 %1150
        %1152 = vrot.lane.b32.xlu0 %v683, 126
        %v1153 = vpop.permute.xlu0 %1152
        %1154 = vrot.lane.b32.xlu0 %v684, 126
        %v1155 = vpop.permute.xlu0 %1154
        %1156 = vrot.lane.b32.xlu0 %v685, 126
        %v1157 = vpop.permute.xlu0 %1156
        %1158 = vrot.lane.b32.xlu0 %v686, 126
        %v1159 = vpop.permute.xlu0 %1158
        %1160 = vrot.lane.b32.xlu0 %v687, 126
        %v1161 = vpop.permute.xlu0 %1160
        %1162 = vrot.lane.b32.xlu0 %v688, 126
        %v1163 = vpop.permute.xlu0 %1162
        %1164 = vrot.lane.b32.xlu0 %v689, 126
        %v1165 = vpop.permute.xlu0 %1164
        %1166 = vrot.lane.b32.xlu0 %v690, 126
        %v1167 = vpop.permute.xlu0 %1166
        %1168 = vrot.lane.b32.xlu0 %v691, 126
        %v1169 = vpop.permute.xlu0 %1168
        %1170 = vrot.lane.b32.xlu0 %v692, 126
        %v1171 = vpop.permute.xlu0 %1170
        %1172 = vrot.lane.b32.xlu0 %v693, 126
        %v1173 = vpop.permute.xlu0 %1172
        %1174 = vrot.lane.b32.xlu0 %v694, 126
        %v1175 = vpop.permute.xlu0 %1174
        %1176 = vrot.lane.b32.xlu0 %v695, 126
        %v1177 = vpop.permute.xlu0 %1176
        %1178 = vrot.lane.b32.xlu0 %v696, 126
        %v1179 = vpop.permute.xlu0 %1178
        %vm1180 = vcmask 1031168
        %v1181 = vsel %vm1180, %v1149, %v1151
        %v1182 = vsel %vm1180, %v1153, %v1155
        %v1183 = vsel %vm1180, %v1157, %v1159
        %v1184 = vsel %vm1180, %v1161, %v1163
        %v1185 = vsel %vm1180, %v1165, %v1167
        %v1186 = vsel %vm1180, %v1169, %v1171
        %v1187 = vsel %vm1180, %v1173, %v1175
        %v1188 = vsel %vm1180, %v1177, %v1179
        %v1198 = vsel %vm311, %v665, 0
        %v1201 = vsel %vm311, %v666, 0
        %v1204 = vsel %vm311, %v667, 0
        %v1207 = vsel %vm311, %v668, 0
        %v1210 = vsel %vm311, %v669, 0
        %v1213 = vsel %vm311, %v670, 0
        %v1216 = vsel %vm311, %v671, 0
        %v1219 = vsel %vm311, %v672, 0
        %v1222 = vsel %vm311, %v673, 0
        %v1225 = vsel %vm311, %v674, 0
        %v1228 = vsel %vm311, %v675, 0
        %v1231 = vsel %vm311, %v676, 0
        %v1234 = vsel %vm311, %v677, 0
        %v1237 = vsel %vm311, %v678, 0
        %v1240 = vsel %vm311, %v679, 0
        %v1243 = vsel %vm311, %v680, 0
        %1245 = vmatprep.subr.mxu0 0.0
        %1246 = vmatpush1.msra.mxu0 %v1181
        %1247 = vmatprep.subr.mxu0 0.0
        %1248 = vmatpush1.msra.mxu0 %v1182
        %1249 = vmatprep.subr.mxu0 0.0
        %1250 = vmatpush1.msra.mxu0 %v1183
        %1251 = vmatprep.subr.mxu0 0.0
        %1252 = vmatpush1.msra.mxu0 %v1184
        %1253 = vmatprep.subr.mxu0 0.0
        %1254 = vmatpush1.msra.mxu0 %v1185
        %1255 = vmatprep.subr.mxu0 0.0
        %1256 = vmatpush1.msra.mxu0 %v1186
        %1257 = vmatprep.subr.mxu0 0.0
        %1258 = vmatpush1.msra.mxu0 %v1187
        %1259 = vmatprep.subr.mxu0 0.0
        %1260 = vmatpush1.msra.mxu0 %v1188
        %1261 = vmatprep.subr.mxu0 0.0
        %1262 = vmatpush1.msra.mxu0 0.0
        %1263 = vmatprep.subr.mxu0 0.0
        %1264 = vmatpush1.msra.mxu0 0.0
        %1265 = vmatprep.subr.mxu0 0.0
        %1266 = vmatpush1.msra.mxu0 0.0
        %1267 = vmatprep.subr.mxu0 0.0
        %1268 = vmatpush1.msra.mxu0 0.0
        %1269 = vmatprep.subr.mxu0 0.0
        %1270 = vmatpush1.msra.mxu0 0.0
        %1271 = vmatprep.subr.mxu0 0.0
        %1272 = vmatpush1.msra.mxu0 0.0
        %1273 = vmatprep.subr.mxu0 0.0
        %1274 = vmatpush1.msra.mxu0 0.0
        %1275 = vmatprep.subr.mxu0 0.0
        %1276 = vmatpush1.msra.mxu0 0.0
        %1277 = vmatprep.subr.mxu0 0.0
        %1278 = vmatpush1.msra.mxu0 0.0
        %1279 = vmatprep.subr.mxu0 0.0
        %1280 = vmatpush1.msra.mxu0 0.0
        %1281 = vmatprep.subr.mxu0 0.0
        %1282 = vmatpush1.msra.mxu0 0.0
        %1283 = vmatprep.subr.mxu0 0.0
        %1284 = vmatpush1.msra.mxu0 0.0
        %1285 = vmatprep.subr.mxu0 0.0
        %1286 = vmatpush1.msra.mxu0 0.0
        %1287 = vmatprep.subr.mxu0 0.0
        %1288 = vmatpush1.msra.mxu0 0.0
        %1289 = vmatprep.subr.mxu0 0.0
        %1290 = vmatpush1.msra.mxu0 0.0
        %1291 = vmatprep.subr.mxu0 0.0
        %1292 = vmatpush1.msra.mxu0 0.0
        %1293 = vmatprep.subr.mxu0 0.0
        %1294 = vmatpush1.msra.mxu0 0.0
        %1295 = vmatprep.subr.mxu0 0.0
        %1296 = vmatpush1.msra.mxu0 0.0
        %1297 = vmatprep.subr.mxu0 0.0
        %1298 = vmatpush1.msra.mxu0 0.0
        %1299 = vmatprep.subr.mxu0 0.0
        %1300 = vmatpush1.msra.mxu0 0.0
        %1301 = vmatprep.subr.mxu0 0.0
        %1302 = vmatpush1.msra.mxu0 0.0
        %1303 = vmatprep.subr.mxu0 0.0
        %1304 = vmatpush1.msra.mxu0 0.0
        %1305 = vmatprep.subr.mxu0 0.0
        %1306 = vmatpush1.msra.mxu0 0.0
        %1307 = vmatprep.subr.mxu0 0.0
        %1308 = vmatpush1.msra.mxu0 0.0
        %1309 = vmatprep.mubr.f32.mxu0 0.0
        %1310 = vmatmul.mubr.f32.gmra.mrb[0].mxu0 %v1198
        %v1311 = vpop.f32.mrb[0].mxu0
        %v1312 = vadd.f32 0.0, %v1311
        %v1313 = vpop.f32.mrb[0].mxu0
        %1314 = vmatprep.mubr.f32.mxu0 0.0
        %1315 = vmatmul.mubr.f32.gmra.mrb[0].mxu0 %v1201
        %v1316 = vpop.f32.mrb[0].mxu0
        %v1317 = vadd.f32 0.0, %v1316
        %v1318 = vpop.f32.mrb[0].mxu0
        %1319 = vmatprep.mubr.f32.mxu0 0.0
        %1320 = vmatmul.mubr.f32.gmra.mrb[0].mxu0 %v1204
        %v1321 = vpop.f32.mrb[0].mxu0
        %v1322 = vadd.f32 0.0, %v1321
        %v1323 = vpop.f32.mrb[0].mxu0
        %1324 = vmatprep.mubr.f32.mxu0 0.0
        %1325 = vmatmul.mubr.f32.gmra.mrb[0].mxu0 %v1207
        %v1326 = vpop.f32.mrb[0].mxu0
        %v1327 = vadd.f32 0.0, %v1326
        %v1328 = vpop.f32.mrb[0].mxu0
        %1329 = vmatprep.mubr.f32.mxu0 0.0
        %1330 = vmatmul.mubr.f32.gmra.mrb[0].mxu0 %v1210
        %v1331 = vpop.f32.mrb[0].mxu0
        %v1332 = vadd.f32 0.0, %v1331
        %v1333 = vpop.f32.mrb[0].mxu0
        %1334 = vmatprep.mubr.f32.mxu0 0.0
        %1335 = vmatmul.mubr.f32.gmra.mrb[0].mxu0 %v1213
        %v1336 = vpop.f32.mrb[0].mxu0
        %v1337 = vadd.f32 0.0, %v1336
        %v1338 = vpop.f32.mrb[0].mxu0
        %1339 = vmatprep.mubr.f32.mxu0 0.0
        %1340 = vmatmul.mubr.f32.gmra.mrb[0].mxu0 %v1216
        %v1341 = vpop.f32.mrb[0].mxu0
        %v1342 = vadd.f32 0.0, %v1341
        %v1343 = vpop.f32.mrb[0].mxu0
        %1344 = vmatprep.mubr.f32.mxu0 0.0
        %1345 = vmatmul.mubr.f32.gmra.mrb[0].mxu0 %v1219
        %v1346 = vpop.f32.mrb[0].mxu0
        %v1347 = vadd.f32 0.0, %v1346
        %v1348 = vpop.f32.mrb[0].mxu0
        %1349 = vmatprep.mubr.f32.mxu0 0.0
        %1350 = vmatmul.mubr.f32.gmra.mrb[0].mxu0 %v1222
        %v1351 = vpop.f32.mrb[0].mxu0
        %v1352 = vadd.f32 0.0, %v1351
        %v1353 = vpop.f32.mrb[0].mxu0
        %1354 = vmatprep.mubr.f32.mxu0 0.0
        %1355 = vmatmul.mubr.f32.gmra.mrb[0].mxu0 %v1225
        %v1356 = vpop.f32.mrb[0].mxu0
        %v1357 = vadd.f32 0.0, %v1356
        %v1358 = vpop.f32.mrb[0].mxu0
        %1359 = vmatprep.mubr.f32.mxu0 0.0
        %1360 = vmatmul.mubr.f32.gmra.mrb[0].mxu0 %v1228
        %v1361 = vpop.f32.mrb[0].mxu0
        %v1362 = vadd.f32 0.0, %v1361
        %v1363 = vpop.f32.mrb[0].mxu0
        %1364 = vmatprep.mubr.f32.mxu0 0.0
        %1365 = vmatmul.mubr.f32.gmra.mrb[0].mxu0 %v1231
        %v1366 = vpop.f32.mrb[0].mxu0
        %v1367 = vadd.f32 0.0, %v1366
        %v1368 = vpop.f32.mrb[0].mxu0
        %1369 = vmatprep.mubr.f32.mxu0 0.0
        %1370 = vmatmul.mubr.f32.gmra.mrb[0].mxu0 %v1234
        %v1371 = vpop.f32.mrb[0].mxu0
        %v1372 = vadd.f32 0.0, %v1371
        %v1373 = vpop.f32.mrb[0].mxu0
        %1374 = vmatprep.mubr.f32.mxu0 0.0
        %1375 = vmatmul.mubr.f32.gmra.mrb[0].mxu0 %v1237
        %v1376 = vpop.f32.mrb[0].mxu0
        %v1377 = vadd.f32 0.0, %v1376
        %v1378 = vpop.f32.mrb[0].mxu0
        %1379 = vmatprep.mubr.f32.mxu0 0.0
        %1380 = vmatmul.mubr.f32.gmra.mrb[0].mxu0 %v1240
        %v1381 = vpop.f32.mrb[0].mxu0
        %v1382 = vadd.f32 0.0, %v1381
        %v1383 = vpop.f32.mrb[0].mxu0
        %1384 = vmatprep.mubr.f32.mxu0 0.0
        %1385 = vmatmul.mubr.f32.gmra.mrb[0].mxu0 %v1243
        %v1386 = vpop.f32.mrb[0].mxu0
        %v1387 = vadd.f32 0.0, %v1386
        %v1388 = vpop.f32.mrb[0].mxu0
        %1389 = vdwg.mxu0
        %v1390 = vadd.f32 %v1070, %v1312
        %v1391 = vadd.f32 %v1075, %v1317
        %v1392 = vadd.f32 %v1080, %v1322
        %v1393 = vadd.f32 %v1085, %v1327
        %v1394 = vadd.f32 %v1090, %v1332
        %v1395 = vadd.f32 %v1095, %v1337
        %v1396 = vadd.f32 %v1100, %v1342
        %v1397 = vadd.f32 %v1105, %v1347
        %v1398 = vadd.f32 %v1110, %v1352
        %v1399 = vadd.f32 %v1115, %v1357
        %v1400 = vadd.f32 %v1120, %v1362
        %v1401 = vadd.f32 %v1125, %v1367
        %v1402 = vadd.f32 %v1130, %v1372
        %v1403 = vadd.f32 %v1135, %v1377
        %v1404 = vadd.f32 %v1140, %v1382
        %v1405 = vadd.f32 %v1145, %v1387
        %v1406 = vld [vmem:[%s2] sm:$0xff]
        %v1407 = vld [vmem:[%s2 + $0x8] sm:$0xff]
        %v1408 = vld [vmem:[%s2 + $0x10] sm:$0xff]
        %v1409 = vld [vmem:[%s2 + $0x18] sm:$0xff]
        %v1410 = vld [vmem:[%s2 + $0x20] sm:$0xff]
        %v1411 = vld [vmem:[%s2 + $0x28] sm:$0xff]
        %v1412 = vld [vmem:[%s2 + $0x30] sm:$0xff]
        %v1413 = vld [vmem:[%s2 + $0x38] sm:$0xff]
        %v1414 = vld [vmem:[%s2 + $0x40] sm:$0xff]
        %v1415 = vld [vmem:[%s2 + $0x48] sm:$0xff]
        %v1416 = vld [vmem:[%s2 + $0x50] sm:$0xff]
        %v1417 = vld [vmem:[%s2 + $0x58] sm:$0xff]
        %v1418 = vld [vmem:[%s2 + $0x60] sm:$0xff]
        %v1419 = vld [vmem:[%s2 + $0x68] sm:$0xff]
        %v1420 = vld [vmem:[%s2 + $0x70] sm:$0xff]
        %v1421 = vld [vmem:[%s2 + $0x78] sm:$0xff]
        %1423 = vset.pattern.permute.xlu0 0
        %1424 = vperm.xlu0 %1423, %v1406
        %v1425 = vpop.permute.xlu0 %1424
        %1428 = vset.pattern.permute.xlu0 0
        %1429 = vperm.xlu0 %1428, %v1407
        %v1430 = vpop.permute.xlu0 %1429
        %1433 = vset.pattern.permute.xlu0 0
        %1434 = vperm.xlu0 %1433, %v1408
        %v1435 = vpop.permute.xlu0 %1434
        %1438 = vset.pattern.permute.xlu0 0
        %1439 = vperm.xlu0 %1438, %v1409
        %v1440 = vpop.permute.xlu0 %1439
        %1443 = vset.pattern.permute.xlu0 0
        %1444 = vperm.xlu0 %1443, %v1410
        %v1445 = vpop.permute.xlu0 %1444
        %1448 = vset.pattern.permute.xlu0 0
        %1449 = vperm.xlu0 %1448, %v1411
        %v1450 = vpop.permute.xlu0 %1449
        %1453 = vset.pattern.permute.xlu0 0
        %1454 = vperm.xlu0 %1453, %v1412
        %v1455 = vpop.permute.xlu0 %1454
        %1458 = vset.pattern.permute.xlu0 0
        %1459 = vperm.xlu0 %1458, %v1413
        %v1460 = vpop.permute.xlu0 %1459
        %1463 = vset.pattern.permute.xlu0 0
        %1464 = vperm.xlu0 %1463, %v1414
        %v1465 = vpop.permute.xlu0 %1464
        %1468 = vset.pattern.permute.xlu0 0
        %1469 = vperm.xlu0 %1468, %v1415
        %v1470 = vpop.permute.xlu0 %1469
        %1473 = vset.pattern.permute.xlu0 0
        %1474 = vperm.xlu0 %1473, %v1416
        %v1475 = vpop.permute.xlu0 %1474
        %1478 = vset.pattern.permute.xlu0 0
        %1479 = vperm.xlu0 %1478, %v1417
        %v1480 = vpop.permute.xlu0 %1479
        %1483 = vset.pattern.permute.xlu0 0
        %1484 = vperm.xlu0 %1483, %v1418
        %v1485 = vpop.permute.xlu0 %1484
        %1488 = vset.pattern.permute.xlu0 0
        %1489 = vperm.xlu0 %1488, %v1419
        %v1490 = vpop.permute.xlu0 %1489
        %1493 = vset.pattern.permute.xlu0 0
        %1494 = vperm.xlu0 %1493, %v1420
        %v1495 = vpop.permute.xlu0 %1494
        %1498 = vset.pattern.permute.xlu0 0
        %1499 = vperm.xlu0 %1498, %v1421
        %v1500 = vpop.permute.xlu0 %1499
        %v1502 = vadd.f32 %v1390, %v1425
        %v1503 = vadd.f32 %v1391, %v1430
        %v1504 = vadd.f32 %v1392, %v1435
        %v1505 = vadd.f32 %v1393, %v1440
        %v1506 = vadd.f32 %v1394, %v1445
        %v1507 = vadd.f32 %v1395, %v1450
        %v1508 = vadd.f32 %v1396, %v1455
        %v1509 = vadd.f32 %v1397, %v1460
        %v1510 = vadd.f32 %v1398, %v1465
        %v1511 = vadd.f32 %v1399, %v1470
        %v1512 = vadd.f32 %v1400, %v1475
        %v1513 = vadd.f32 %v1401, %v1480
        %v1514 = vadd.f32 %v1402, %v1485
        %v1515 = vadd.f32 %v1403, %v1490
        %v1516 = vadd.f32 %v1404, %v1495
        %v1517 = vadd.f32 %v1405, %v1500
        %1518 = vadd.xlane.f32.xlu0 %v1502
        %v1519 = vpop.xlane.xlu0 %1518
        %1520 = vadd.xlane.f32.xlu0 %v1503
        %v1521 = vpop.xlane.xlu0 %1520
        %1522 = vadd.xlane.f32.xlu0 %v1504
        %v1523 = vpop.xlane.xlu0 %1522
        %1524 = vadd.xlane.f32.xlu0 %v1505
        %v1525 = vpop.xlane.xlu0 %1524
        %1526 = vadd.xlane.f32.xlu0 %v1506
        %v1527 = vpop.xlane.xlu0 %1526
        %1528 = vadd.xlane.f32.xlu0 %v1507
        %v1529 = vpop.xlane.xlu0 %1528
        %1530 = vadd.xlane.f32.xlu0 %v1508
        %v1531 = vpop.xlane.xlu0 %1530
        %1532 = vadd.xlane.f32.xlu0 %v1509
        %v1533 = vpop.xlane.xlu0 %1532
        %1534 = vadd.xlane.f32.xlu0 %v1510
        %v1535 = vpop.xlane.xlu0 %1534
        %1536 = vadd.xlane.f32.xlu0 %v1511
        %v1537 = vpop.xlane.xlu0 %1536
        %1538 = vadd.xlane.f32.xlu0 %v1512
        %v1539 = vpop.xlane.xlu0 %1538
        %1540 = vadd.xlane.f32.xlu0 %v1513
        %v1541 = vpop.xlane.xlu0 %1540
        %1542 = vadd.xlane.f32.xlu0 %v1514
        %v1543 = vpop.xlane.xlu0 %1542
        %1544 = vadd.xlane.f32.xlu0 %v1515
        %v1545 = vpop.xlane.xlu0 %1544
        %1546 = vadd.xlane.f32.xlu0 %v1516
        %v1547 = vpop.xlane.xlu0 %1546
        %1548 = vadd.xlane.f32.xlu0 %v1517
        %v1549 = vpop.xlane.xlu0 %1548
        %v1550 = vadd.f32 %v1519, %v1521
        %v1551 = vrot.slane %v1550, 4
        %v1552 = vadd.f32 %v1550, %v1551
        %v1553 = vrot.slane %v1552, 2
        %v1554 = vadd.f32 %v1552, %v1553
        %v1555 = vrot.slane %v1554, 1
        %v1556 = vadd.f32 %v1554, %v1555
        %v1557 = vadd.f32 %v1523, %v1525
        %v1558 = vrot.slane %v1557, 4
        %v1559 = vadd.f32 %v1557, %v1558
        %v1560 = vrot.slane %v1559, 2
        %v1561 = vadd.f32 %v1559, %v1560
        %v1562 = vrot.slane %v1561, 1
        %v1563 = vadd.f32 %v1561, %v1562
        %v1564 = vadd.f32 %v1527, %v1529
        %v1565 = vrot.slane %v1564, 4
        %v1566 = vadd.f32 %v1564, %v1565
        %v1567 = vrot.slane %v1566, 2
        %v1568 = vadd.f32 %v1566, %v1567
        %v1569 = vrot.slane %v1568, 1
        %v1570 = vadd.f32 %v1568, %v1569
        %v1571 = vadd.f32 %v1531, %v1533
        %v1572 = vrot.slane %v1571, 4
        %v1573 = vadd.f32 %v1571, %v1572
        %v1574 = vrot.slane %v1573, 2
        %v1575 = vadd.f32 %v1573, %v1574
        %v1576 = vrot.slane %v1575, 1
        %v1577 = vadd.f32 %v1575, %v1576
        %v1578 = vadd.f32 %v1535, %v1537
        %v1579 = vrot.slane %v1578, 4
        %v1580 = vadd.f32 %v1578, %v1579
        %v1581 = vrot.slane %v1580, 2
        %v1582 = vadd.f32 %v1580, %v1581
        %v1583 = vrot.slane %v1582, 1
        %v1584 = vadd.f32 %v1582, %v1583
        %v1585 = vadd.f32 %v1539, %v1541
        %v1586 = vrot.slane %v1585, 4
        %v1587 = vadd.f32 %v1585, %v1586
        %v1588 = vrot.slane %v1587, 2
        %v1589 = vadd.f32 %v1587, %v1588
        %v1590 = vrot.slane %v1589, 1
        %v1591 = vadd.f32 %v1589, %v1590
        %v1592 = vadd.f32 %v1543, %v1545
        %v1593 = vrot.slane %v1592, 4
        %v1594 = vadd.f32 %v1592, %v1593
        %v1595 = vrot.slane %v1594, 2
        %v1596 = vadd.f32 %v1594, %v1595
        %v1597 = vrot.slane %v1596, 1
        %v1598 = vadd.f32 %v1596, %v1597
        %v1599 = vadd.f32 %v1547, %v1549
        %v1600 = vrot.slane %v1599, 4
        %v1601 = vadd.f32 %v1599, %v1600
        %v1602 = vrot.slane %v1601, 2
        %v1603 = vadd.f32 %v1601, %v1602
        %v1604 = vrot.slane %v1603, 1
        %v1605 = vadd.f32 %v1603, %v1604
        %v1606 = vmul.f32 %v1556, 0.00048828125
        %v1607 = vmul.f32 %v1563, 0.00048828125
        %v1608 = vmul.f32 %v1570, 0.00048828125
        %v1609 = vmul.f32 %v1577, 0.00048828125
        %v1610 = vmul.f32 %v1584, 0.00048828125
        %v1611 = vmul.f32 %v1591, 0.00048828125
        %v1612 = vmul.f32 %v1598, 0.00048828125
        %v1613 = vmul.f32 %v1605, 0.00048828125
        %v1614 = vsub.f32 %v1502, %v1606
        %v1615 = vsub.f32 %v1503, %v1606
        %v1616 = vsub.f32 %v1504, %v1607
        %v1617 = vsub.f32 %v1505, %v1607
        %v1618 = vsub.f32 %v1506, %v1608
        %v1619 = vsub.f32 %v1507, %v1608
        %v1620 = vsub.f32 %v1508, %v1609
        %v1621 = vsub.f32 %v1509, %v1609
        %v1622 = vsub.f32 %v1510, %v1610
        %v1623 = vsub.f32 %v1511, %v1610
        %v1624 = vsub.f32 %v1512, %v1611
        %v1625 = vsub.f32 %v1513, %v1611
        %v1626 = vsub.f32 %v1514, %v1612
        %v1627 = vsub.f32 %v1515, %v1612
        %v1628 = vsub.f32 %v1516, %v1613
        %v1629 = vsub.f32 %v1517, %v1613
        %v1630 = vmul.f32 %v1614, %v1614
        %v1631 = vmul.f32 %v1615, %v1615
        %v1632 = vmul.f32 %v1616, %v1616
        %v1633 = vmul.f32 %v1617, %v1617
        %v1634 = vmul.f32 %v1618, %v1618
        %v1635 = vmul.f32 %v1619, %v1619
        %v1636 = vmul.f32 %v1620, %v1620
        %v1637 = vmul.f32 %v1621, %v1621
        %v1638 = vmul.f32 %v1622, %v1622
        %v1639 = vmul.f32 %v1623, %v1623
        %v1640 = vmul.f32 %v1624, %v1624
        %v1641 = vmul.f32 %v1625, %v1625
        %v1642 = vmul.f32 %v1626, %v1626
        %v1643 = vmul.f32 %v1627, %v1627
        %v1644 = vmul.f32 %v1628, %v1628
        %v1645 = vmul.f32 %v1629, %v1629
        %1646 = vadd.xlane.f32.xlu0 %v1630
        %v1647 = vpop.xlane.xlu0 %1646
        %1648 = vadd.xlane.f32.xlu0 %v1631
        %v1649 = vpop.xlane.xlu0 %1648
        %1650 = vadd.xlane.f32.xlu0 %v1632
        %v1651 = vpop.xlane.xlu0 %1650
        %1652 = vadd.xlane.f32.xlu0 %v1633
        %v1653 = vpop.xlane.xlu0 %1652
        %1654 = vadd.xlane.f32.xlu0 %v1634
        %v1655 = vpop.xlane.xlu0 %1654
        %1656 = vadd.xlane.f32.xlu0 %v1635
        %v1657 = vpop.xlane.xlu0 %1656
        %1658 = vadd.xlane.f32.xlu0 %v1636
        %v1659 = vpop.xlane.xlu0 %1658
        %1660 = vadd.xlane.f32.xlu0 %v1637
        %v1661 = vpop.xlane.xlu0 %1660
        %1662 = vadd.xlane.f32.xlu0 %v1638
        %v1663 = vpop.xlane.xlu0 %1662
        %1664 = vadd.xlane.f32.xlu0 %v1639
        %v1665 = vpop.xlane.xlu0 %1664
        %1666 = vadd.xlane.f32.xlu0 %v1640
        %v1667 = vpop.xlane.xlu0 %1666
        %1668 = vadd.xlane.f32.xlu0 %v1641
        %v1669 = vpop.xlane.xlu0 %1668
        %1670 = vadd.xlane.f32.xlu0 %v1642
        %v1671 = vpop.xlane.xlu0 %1670
        %1672 = vadd.xlane.f32.xlu0 %v1643
        %v1673 = vpop.xlane.xlu0 %1672
        %1674 = vadd.xlane.f32.xlu0 %v1644
        %v1675 = vpop.xlane.xlu0 %1674
        %1676 = vadd.xlane.f32.xlu0 %v1645
        %v1677 = vpop.xlane.xlu0 %1676
        %v1678 = vadd.f32 %v1647, %v1649
        %v1679 = vrot.slane %v1678, 4
        %v1680 = vadd.f32 %v1678, %v1679
        %v1681 = vrot.slane %v1680, 2
        %v1682 = vadd.f32 %v1680, %v1681
        %v1683 = vrot.slane %v1682, 1
        %v1684 = vadd.f32 %v1682, %v1683
        %v1685 = vadd.f32 %v1651, %v1653
        %v1686 = vrot.slane %v1685, 4
        %v1687 = vadd.f32 %v1685, %v1686
        %v1688 = vrot.slane %v1687, 2
        %v1689 = vadd.f32 %v1687, %v1688
        %v1690 = vrot.slane %v1689, 1
        %v1691 = vadd.f32 %v1689, %v1690
        %v1692 = vadd.f32 %v1655, %v1657
        %v1693 = vrot.slane %v1692, 4
        %v1694 = vadd.f32 %v1692, %v1693
        %v1695 = vrot.slane %v1694, 2
        %v1696 = vadd.f32 %v1694, %v1695
        %v1697 = vrot.slane %v1696, 1
        %v1698 = vadd.f32 %v1696, %v1697
        %v1699 = vadd.f32 %v1659, %v1661
        %v1700 = vrot.slane %v1699, 4
        %v1701 = vadd.f32 %v1699, %v1700
        %v1702 = vrot.slane %v1701, 2
        %v1703 = vadd.f32 %v1701, %v1702
        %v1704 = vrot.slane %v1703, 1
        %v1705 = vadd.f32 %v1703, %v1704
        %v1706 = vadd.f32 %v1663, %v1665
        %v1707 = vrot.slane %v1706, 4
        %v1708 = vadd.f32 %v1706, %v1707
        %v1709 = vrot.slane %v1708, 2
        %v1710 = vadd.f32 %v1708, %v1709
        %v1711 = vrot.slane %v1710, 1
        %v1712 = vadd.f32 %v1710, %v1711
        %v1713 = vadd.f32 %v1667, %v1669
        %v1714 = vrot.slane %v1713, 4
        %v1715 = vadd.f32 %v1713, %v1714
        %v1716 = vrot.slane %v1715, 2
        %v1717 = vadd.f32 %v1715, %v1716
        %v1718 = vrot.slane %v1717, 1
        %v1719 = vadd.f32 %v1717, %v1718
        %v1720 = vadd.f32 %v1671, %v1673
        %v1721 = vrot.slane %v1720, 4
        %v1722 = vadd.f32 %v1720, %v1721
        %v1723 = vrot.slane %v1722, 2
        %v1724 = vadd.f32 %v1722, %v1723
        %v1725 = vrot.slane %v1724, 1
        %v1726 = vadd.f32 %v1724, %v1725
        %v1727 = vadd.f32 %v1675, %v1677
        %v1728 = vrot.slane %v1727, 4
        %v1729 = vadd.f32 %v1727, %v1728
        %v1730 = vrot.slane %v1729, 2
        %v1731 = vadd.f32 %v1729, %v1730
        %v1732 = vrot.slane %v1731, 1
        %v1733 = vadd.f32 %v1731, %v1732
        %v1734 = vmul.f32 %v1684, 0.00048828125
        %v1735 = vmul.f32 %v1691, 0.00048828125
        %v1736 = vmul.f32 %v1698, 0.00048828125
        %v1737 = vmul.f32 %v1705, 0.00048828125
        %v1738 = vmul.f32 %v1712, 0.00048828125
        %v1739 = vmul.f32 %v1719, 0.00048828125
        %v1740 = vmul.f32 %v1726, 0.00048828125
        %v1741 = vmul.f32 %v1733, 0.00048828125
        %v1742 = vadd.f32 %v1734, 1e-05
        %v1743 = vadd.f32 %v1735, 1e-05
        %v1744 = vadd.f32 %v1736, 1e-05
        %v1745 = vadd.f32 %v1737, 1e-05
        %v1746 = vadd.f32 %v1738, 1e-05
        %v1747 = vadd.f32 %v1739, 1e-05
        %v1748 = vadd.f32 %v1740, 1e-05
        %v1749 = vadd.f32 %v1741, 1e-05
        %v1750 = vrsqrt.pop %v1742
        %v1751 = vrsqrt.pop %v1743
        %v1752 = vrsqrt.pop %v1744
        %v1753 = vrsqrt.pop %v1745
        %v1754 = vrsqrt.pop %v1746
        %v1755 = vrsqrt.pop %v1747
        %v1756 = vrsqrt.pop %v1748
        %v1757 = vrsqrt.pop %v1749
        %v1758 = vmul.f32 %v1614, %v1750
        %v1759 = vmul.f32 %v1615, %v1750
        %v1760 = vmul.f32 %v1616, %v1751
        %v1761 = vmul.f32 %v1617, %v1751
        %v1762 = vmul.f32 %v1618, %v1752
        %v1763 = vmul.f32 %v1619, %v1752
        %v1764 = vmul.f32 %v1620, %v1753
        %v1765 = vmul.f32 %v1621, %v1753
        %v1766 = vmul.f32 %v1622, %v1754
        %v1767 = vmul.f32 %v1623, %v1754
        %v1768 = vmul.f32 %v1624, %v1755
        %v1769 = vmul.f32 %v1625, %v1755
        %v1770 = vmul.f32 %v1626, %v1756
        %v1771 = vmul.f32 %v1627, %v1756
        %v1772 = vmul.f32 %v1628, %v1757
        %v1773 = vmul.f32 %v1629, %v1757
        %v1774 = vld [vmem:[%s257] sm:$0xff]
        %v1775 = vld [vmem:[%s257 + $0x8] sm:$0xff]
        %v1776 = vld [vmem:[%s257 + $0x10] sm:$0xff]
        %v1777 = vld [vmem:[%s257 + $0x18] sm:$0xff]
        %v1778 = vld [vmem:[%s257 + $0x20] sm:$0xff]
        %v1779 = vld [vmem:[%s257 + $0x28] sm:$0xff]
        %v1780 = vld [vmem:[%s257 + $0x30] sm:$0xff]
        %v1781 = vld [vmem:[%s257 + $0x38] sm:$0xff]
        %v1782 = vld [vmem:[%s257 + $0x40] sm:$0xff]
        %v1783 = vld [vmem:[%s257 + $0x48] sm:$0xff]
        %v1784 = vld [vmem:[%s257 + $0x50] sm:$0xff]
        %v1785 = vld [vmem:[%s257 + $0x58] sm:$0xff]
        %v1786 = vld [vmem:[%s257 + $0x60] sm:$0xff]
        %v1787 = vld [vmem:[%s257 + $0x68] sm:$0xff]
        %v1788 = vld [vmem:[%s257 + $0x70] sm:$0xff]
        %v1789 = vld [vmem:[%s257 + $0x78] sm:$0xff]
        %1791 = vset.pattern.permute.xlu0 0
        %1792 = vperm.xlu0 %1791, %v1774
        %v1793 = vpop.permute.xlu0 %1792
        %1796 = vset.pattern.permute.xlu0 0
        %1797 = vperm.xlu0 %1796, %v1775
        %v1798 = vpop.permute.xlu0 %1797
        %1801 = vset.pattern.permute.xlu0 0
        %1802 = vperm.xlu0 %1801, %v1776
        %v1803 = vpop.permute.xlu0 %1802
        %1806 = vset.pattern.permute.xlu0 0
        %1807 = vperm.xlu0 %1806, %v1777
        %v1808 = vpop.permute.xlu0 %1807
        %1811 = vset.pattern.permute.xlu0 0
        %1812 = vperm.xlu0 %1811, %v1778
        %v1813 = vpop.permute.xlu0 %1812
        %1816 = vset.pattern.permute.xlu0 0
        %1817 = vperm.xlu0 %1816, %v1779
        %v1818 = vpop.permute.xlu0 %1817
        %1821 = vset.pattern.permute.xlu0 0
        %1822 = vperm.xlu0 %1821, %v1780
        %v1823 = vpop.permute.xlu0 %1822
        %1826 = vset.pattern.permute.xlu0 0
        %1827 = vperm.xlu0 %1826, %v1781
        %v1828 = vpop.permute.xlu0 %1827
        %1831 = vset.pattern.permute.xlu0 0
        %1832 = vperm.xlu0 %1831, %v1782
        %v1833 = vpop.permute.xlu0 %1832
        %1836 = vset.pattern.permute.xlu0 0
        %1837 = vperm.xlu0 %1836, %v1783
        %v1838 = vpop.permute.xlu0 %1837
        %1841 = vset.pattern.permute.xlu0 0
        %1842 = vperm.xlu0 %1841, %v1784
        %v1843 = vpop.permute.xlu0 %1842
        %1846 = vset.pattern.permute.xlu0 0
        %1847 = vperm.xlu0 %1846, %v1785
        %v1848 = vpop.permute.xlu0 %1847
        %1851 = vset.pattern.permute.xlu0 0
        %1852 = vperm.xlu0 %1851, %v1786
        %v1853 = vpop.permute.xlu0 %1852
        %1856 = vset.pattern.permute.xlu0 0
        %1857 = vperm.xlu0 %1856, %v1787
        %v1858 = vpop.permute.xlu0 %1857
        %1861 = vset.pattern.permute.xlu0 0
        %1862 = vperm.xlu0 %1861, %v1788
        %v1863 = vpop.permute.xlu0 %1862
        %1866 = vset.pattern.permute.xlu0 0
        %1867 = vperm.xlu0 %1866, %v1789
        %v1868 = vpop.permute.xlu0 %1867
        %v1870 = vmul.f32 %v1758, %v1793
        %v1871 = vmul.f32 %v1759, %v1798
        %v1872 = vmul.f32 %v1760, %v1803
        %v1873 = vmul.f32 %v1761, %v1808
        %v1874 = vmul.f32 %v1762, %v1813
        %v1875 = vmul.f32 %v1763, %v1818
        %v1876 = vmul.f32 %v1764, %v1823
        %v1877 = vmul.f32 %v1765, %v1828
        %v1878 = vmul.f32 %v1766, %v1833
        %v1879 = vmul.f32 %v1767, %v1838
        %v1880 = vmul.f32 %v1768, %v1843
        %v1881 = vmul.f32 %v1769, %v1848
        %v1882 = vmul.f32 %v1770, %v1853
        %v1883 = vmul.f32 %v1771, %v1858
        %v1884 = vmul.f32 %v1772, %v1863
        %v1885 = vmul.f32 %v1773, %v1868
        %v1886 = vld [vmem:[%s262] sm:$0xff]
        %v1887 = vld [vmem:[%s262 + $0x8] sm:$0xff]
        %v1888 = vld [vmem:[%s262 + $0x10] sm:$0xff]
        %v1889 = vld [vmem:[%s262 + $0x18] sm:$0xff]
        %v1890 = vld [vmem:[%s262 + $0x20] sm:$0xff]
        %v1891 = vld [vmem:[%s262 + $0x28] sm:$0xff]
        %v1892 = vld [vmem:[%s262 + $0x30] sm:$0xff]
        %v1893 = vld [vmem:[%s262 + $0x38] sm:$0xff]
        %v1894 = vld [vmem:[%s262 + $0x40] sm:$0xff]
        %v1895 = vld [vmem:[%s262 + $0x48] sm:$0xff]
        %v1896 = vld [vmem:[%s262 + $0x50] sm:$0xff]
        %v1897 = vld [vmem:[%s262 + $0x58] sm:$0xff]
        %v1898 = vld [vmem:[%s262 + $0x60] sm:$0xff]
        %v1899 = vld [vmem:[%s262 + $0x68] sm:$0xff]
        %v1900 = vld [vmem:[%s262 + $0x70] sm:$0xff]
        %v1901 = vld [vmem:[%s262 + $0x78] sm:$0xff]
        %1903 = vset.pattern.permute.xlu0 0
        %1904 = vperm.xlu0 %1903, %v1886
        %v1905 = vpop.permute.xlu0 %1904
        %1908 = vset.pattern.permute.xlu0 0
        %1909 = vperm.xlu0 %1908, %v1887
        %v1910 = vpop.permute.xlu0 %1909
        %1913 = vset.pattern.permute.xlu0 0
        %1914 = vperm.xlu0 %1913, %v1888
        %v1915 = vpop.permute.xlu0 %1914
        %1918 = vset.pattern.permute.xlu0 0
        %1919 = vperm.xlu0 %1918, %v1889
        %v1920 = vpop.permute.xlu0 %1919
        %1923 = vset.pattern.permute.xlu0 0
        %1924 = vperm.xlu0 %1923, %v1890
        %v1925 = vpop.permute.xlu0 %1924
        %1928 = vset.pattern.permute.xlu0 0
        %1929 = vperm.xlu0 %1928, %v1891
        %v1930 = vpop.permute.xlu0 %1929
        %1933 = vset.pattern.permute.xlu0 0
        %1934 = vperm.xlu0 %1933, %v1892
        %v1935 = vpop.permute.xlu0 %1934
        %1938 = vset.pattern.permute.xlu0 0
        %1939 = vperm.xlu0 %1938, %v1893
        %v1940 = vpop.permute.xlu0 %1939
        %1943 = vset.pattern.permute.xlu0 0
        %1944 = vperm.xlu0 %1943, %v1894
        %v1945 = vpop.permute.xlu0 %1944
        %1948 = vset.pattern.permute.xlu0 0
        %1949 = vperm.xlu0 %1948, %v1895
        %v1950 = vpop.permute.xlu0 %1949
        %1953 = vset.pattern.permute.xlu0 0
        %1954 = vperm.xlu0 %1953, %v1896
        %v1955 = vpop.permute.xlu0 %1954
        %1958 = vset.pattern.permute.xlu0 0
        %1959 = vperm.xlu0 %1958, %v1897
        %v1960 = vpop.permute.xlu0 %1959
        %1963 = vset.pattern.permute.xlu0 0
        %1964 = vperm.xlu0 %1963, %v1898
        %v1965 = vpop.permute.xlu0 %1964
        %1968 = vset.pattern.permute.xlu0 0
        %1969 = vperm.xlu0 %1968, %v1899
        %v1970 = vpop.permute.xlu0 %1969
        %1973 = vset.pattern.permute.xlu0 0
        %1974 = vperm.xlu0 %1973, %v1900
        %v1975 = vpop.permute.xlu0 %1974
        %1978 = vset.pattern.permute.xlu0 0
        %1979 = vperm.xlu0 %1978, %v1901
        %v1980 = vpop.permute.xlu0 %1979
        %v1982 = vadd.f32 %v1870, %v1905
        %v1983 = vadd.f32 %v1871, %v1910
        %v1984 = vadd.f32 %v1872, %v1915
        %v1985 = vadd.f32 %v1873, %v1920
        %v1986 = vadd.f32 %v1874, %v1925
        %v1987 = vadd.f32 %v1875, %v1930
        %v1988 = vadd.f32 %v1876, %v1935
        %v1989 = vadd.f32 %v1877, %v1940
        %v1990 = vadd.f32 %v1878, %v1945
        %v1991 = vadd.f32 %v1879, %v1950
        %v1992 = vadd.f32 %v1880, %v1955
        %v1993 = vadd.f32 %v1881, %v1960
        %v1994 = vadd.f32 %v1882, %v1965
        %v1995 = vadd.f32 %v1883, %v1970
        %v1996 = vadd.f32 %v1884, %v1975
        %v1997 = vadd.f32 %v1885, %v1980
        %v1998 = vxor.u32 %v1982, 2147483648
        %v1999 = vxor.u32 %v1983, 2147483648
        %v2000 = vxor.u32 %v1984, 2147483648
        %v2001 = vxor.u32 %v1985, 2147483648
        %v2002 = vxor.u32 %v1986, 2147483648
        %v2003 = vxor.u32 %v1987, 2147483648
        %v2004 = vxor.u32 %v1988, 2147483648
        %v2005 = vxor.u32 %v1989, 2147483648
        %v2006 = vxor.u32 %v1990, 2147483648
        %v2007 = vxor.u32 %v1991, 2147483648
        %v2008 = vxor.u32 %v1992, 2147483648
        %v2009 = vxor.u32 %v1993, 2147483648
        %v2010 = vxor.u32 %v1994, 2147483648
        %v2011 = vxor.u32 %v1995, 2147483648
        %v2012 = vxor.u32 %v1996, 2147483648
        %v2013 = vxor.u32 %v1997, 2147483648
        %v2014 = vmul.f32 %v1998, 1.442695
        %v2015 = vpow.pop %v2014
        %v2016 = vmul.f32 %v1999, 1.442695
        %v2017 = vpow.pop %v2016
        %v2018 = vmul.f32 %v2000, 1.442695
        %v2019 = vpow.pop %v2018
        %v2020 = vmul.f32 %v2001, 1.442695
        %v2021 = vpow.pop %v2020
        %v2022 = vmul.f32 %v2002, 1.442695
        %v2023 = vpow.pop %v2022
        %v2024 = vmul.f32 %v2003, 1.442695
        %v2025 = vpow.pop %v2024
        %v2026 = vmul.f32 %v2004, 1.442695
        %v2027 = vpow.pop %v2026
        %v2028 = vmul.f32 %v2005, 1.442695
        %v2029 = vpow.pop %v2028
        %v2030 = vmul.f32 %v2006, 1.442695
        %v2031 = vpow.pop %v2030
        %v2032 = vmul.f32 %v2007, 1.442695
        %v2033 = vpow.pop %v2032
        %v2034 = vmul.f32 %v2008, 1.442695
        %v2035 = vpow.pop %v2034
        %v2036 = vmul.f32 %v2009, 1.442695
        %v2037 = vpow.pop %v2036
        %v2038 = vmul.f32 %v2010, 1.442695
        %v2039 = vpow.pop %v2038
        %v2040 = vmul.f32 %v2011, 1.442695
        %v2041 = vpow.pop %v2040
        %v2042 = vmul.f32 %v2012, 1.442695
        %v2043 = vpow.pop %v2042
        %v2044 = vmul.f32 %v2013, 1.442695
        %v2045 = vpow.pop %v2044
        %v2046 = vadd.f32 %v2015, 1.0
        %v2047 = vadd.f32 %v2017, 1.0
        %v2048 = vadd.f32 %v2019, 1.0
        %v2049 = vadd.f32 %v2021, 1.0
        %v2050 = vadd.f32 %v2023, 1.0
        %v2051 = vadd.f32 %v2025, 1.0
        %v2052 = vadd.f32 %v2027, 1.0
        %v2053 = vadd.f32 %v2029, 1.0
        %v2054 = vadd.f32 %v2031, 1.0
        %v2055 = vadd.f32 %v2033, 1.0
        %v2056 = vadd.f32 %v2035, 1.0
        %v2057 = vadd.f32 %v2037, 1.0
        %v2058 = vadd.f32 %v2039, 1.0
        %v2059 = vadd.f32 %v2041, 1.0
        %v2060 = vadd.f32 %v2043, 1.0
        %v2061 = vadd.f32 %v2045, 1.0
        %v2062 = vrcp.pop %v2046
        %v2063 = vmul.f32 1.0, %v2062
        %v2064 = vrcp.pop %v2047
        %v2065 = vmul.f32 1.0, %v2064
        %v2066 = vrcp.pop %v2048
        %v2067 = vmul.f32 1.0, %v2066
        %v2068 = vrcp.pop %v2049
        %v2069 = vmul.f32 1.0, %v2068
        %v2070 = vrcp.pop %v2050
        %v2071 = vmul.f32 1.0, %v2070
        %v2072 = vrcp.pop %v2051
        %v2073 = vmul.f32 1.0, %v2072
        %v2074 = vrcp.pop %v2052
        %v2075 = vmul.f32 1.0, %v2074
        %v2076 = vrcp.pop %v2053
        %v2077 = vmul.f32 1.0, %v2076
        %v2078 = vrcp.pop %v2054
        %v2079 = vmul.f32 1.0, %v2078
        %v2080 = vrcp.pop %v2055
        %v2081 = vmul.f32 1.0, %v2080
        %v2082 = vrcp.pop %v2056
        %v2083 = vmul.f32 1.0, %v2082
        %v2084 = vrcp.pop %v2057
        %v2085 = vmul.f32 1.0, %v2084
        %v2086 = vrcp.pop %v2058
        %v2087 = vmul.f32 1.0, %v2086
        %v2088 = vrcp.pop %v2059
        %v2089 = vmul.f32 1.0, %v2088
        %v2090 = vrcp.pop %v2060
        %v2091 = vmul.f32 1.0, %v2090
        %v2092 = vrcp.pop %v2061
        %v2093 = vmul.f32 1.0, %v2092
        %v2094 = vmul.f32 %v1982, %v2063
        %v2095 = vmul.f32 %v1983, %v2065
        %v2096 = vmul.f32 %v1984, %v2067
        %v2097 = vmul.f32 %v1985, %v2069
        %v2098 = vmul.f32 %v1986, %v2071
        %v2099 = vmul.f32 %v1987, %v2073
        %v2100 = vmul.f32 %v1988, %v2075
        %v2101 = vmul.f32 %v1989, %v2077
        %v2102 = vmul.f32 %v1990, %v2079
        %v2103 = vmul.f32 %v1991, %v2081
        %v2104 = vmul.f32 %v1992, %v2083
        %v2105 = vmul.f32 %v1993, %v2085
        %v2106 = vmul.f32 %v1994, %v2087
        %v2107 = vmul.f32 %v1995, %v2089
        %v2108 = vmul.f32 %v1996, %v2091
        %v2109 = vmul.f32 %v1997, %v2093
        %2110 = vst [vmem:[%s247] sm:$0xff] %v2094
        %2111 = vst [vmem:[%s247 + $0x8] sm:$0xff] %v2095
        %2112 = vst [vmem:[%s247 + $0x10] sm:$0xff] %v2096
        %2113 = vst [vmem:[%s247 + $0x18] sm:$0xff] %v2097
        %2114 = vst [vmem:[%s247 + $0x20] sm:$0xff] %v2098
        %2115 = vst [vmem:[%s247 + $0x28] sm:$0xff] %v2099
        %2116 = vst [vmem:[%s247 + $0x30] sm:$0xff] %v2100
        %2117 = vst [vmem:[%s247 + $0x38] sm:$0xff] %v2101
        %2118 = vst [vmem:[%s247 + $0x40] sm:$0xff] %v2102
        %2119 = vst [vmem:[%s247 + $0x48] sm:$0xff] %v2103
        %2120 = vst [vmem:[%s247 + $0x50] sm:$0xff] %v2104
        %2121 = vst [vmem:[%s247 + $0x58] sm:$0xff] %v2105
        %2122 = vst [vmem:[%s247 + $0x60] sm:$0xff] %v2106
        %2123 = vst [vmem:[%s247 + $0x68] sm:$0xff] %v2107
        %2124 = vst [vmem:[%s247 + $0x70] sm:$0xff] %v2108
        %2125 = vst [vmem:[%s247 + $0x78] sm:$0xff] %v2109
        %s2126 = sand.u32 %s147, 1
        %s2127 = scalar_lea.sflag [#allocation3], %s2126
        %s2128 = sand.u32 %s147, 1
        %s2129 = smul.addr %s2128, 128
        %s2130 = scalar_lea.vmem [#allocation2], %s2129
        // Predicated region
        $region41: #{block_forward.1} parent=39 // pred_check
          %p2131 = pneg %p157
        $region42: #{block_forward.1} parent=39 // pred_check_branch
          %2133 = sbr.rel (%p2131) target = $region44
        $region43: #{block_forward.1} parent=39 // pred_region
          %s2135 = ssub.s32 2048, 2048
          %2136 = vsyncadd %s2127, %s2135
          %s2137 = smul.addr %s19, 16
          %s2138 = smul.addr %s2137, 128
          %s2139 = scalar_lea.hbm %s5, %s2138
          %s2140 = sshll.u32 %s2130, 4
          %s2141 = int_to_ptr.vmem [resolvable:$true] %s2140
          %2146 = dma.vmem_to_hbm [thread:$0]  %s2141, 2048, %s2139, %s2127, 128, 128, 8
        $region44: #{block_forward.1} parent=39 // pred_fallthru
          _
      $region40: #{block_forward.1} parent=5 // pred_fallthru
        _
      %p2147 = scmp.le.s32.totalorder 2, %s14
      // Predicated region
      $region45: #{block_forward.1} parent=5 // pred_check
        %p2148 = pneg %p2147
      $region46: #{block_forward.1} parent=5 // pred_check_branch
        %2150 = sbr.rel (%p2148) target = $region48
      $region47: #{block_forward.1} parent=5 // pred_region
        %s2151 = ssub.s32 %s14, 2
        // Predicated region
        $region49: #{block_forward.1} parent=47 // pred_check
          %p2152 = pneg %p163
        $region50: #{block_forward.1} parent=47 // pred_check_branch
          %2154 = sbr.rel (%p2152) target = $region52
        $region51: #{block_forward.1} parent=47 // pred_region
          %s2155 = sand.u32 %s148, 1
          %s2156 = scalar_lea.sflag [#allocation3], %s2155
          %s2157 = sand.u32 %s148, 1
          %s2158 = smul.addr %s2157, 128
          %s2159 = scalar_lea.vmem [#allocation2], %s2158
          %2160 = dma.done %s2156, 2048
        $region52: #{block_forward.1} parent=47 // pred_fallthru
          _
      $region48: #{block_forward.1} parent=5 // pred_fallthru
        _
    $region6: #{block_forward.1} parent=1 // loop_footer
      %s18 = sadd.s32 1, %s14
    $region7: #{block_forward.1} parent=1 // loop_footer_branch
      %13 = sbr.rel target = $region3
    $region8: #{block_forward.1} parent=1 // loop_exit
      _
    %2161 = vsyncpa [#allocation3], 1
    %s2162 = scalar_lea.sflag [#allocation3], 1
    %2163 = vsyncpa %s2162, 1

</llo_original>
